<compile_context>
chip_gen: v7x
topology: tpu7x:2x2x1
jax: 0.10.0
libtpu: 0.0.40
codegen_flags: <defaults>
</compile_context>

<pallas_src>
import jax
import jax.numpy as jnp
from jax import lax
from jax.experimental import pallas as pl
from jax.experimental.pallas import tpu as pltpu

EPS = 1e-5          # nn.BatchNorm3d default eps
_LANES = 128
_MiB = 1024 * 1024


def _round_up(a, b):
    return ((a + b - 1) // b) * b


def _pick_tile(dhw, tm_budget):
    """Largest lane-aligned (multiple-of-128) DHW tile that fits the VMEM budget.

    Either the returned tile divides dhw exactly, or the caller zero-pads DHW up to
    a multiple of it (exact for the statistics: padding zeros contribute nothing and
    the sample count M uses the true DHW)."""
    tm_budget = max(_LANES, (tm_budget // _LANES) * _LANES)
    dhw128 = _round_up(dhw, _LANES)
    if tm_budget >= dhw128:
        return dhw128                              # one lane-dense tile per n
    for t in range(tm_budget, _LANES - 1, -_LANES):
        if dhw % t == 0:
            return t                               # exact divisor: no padding needed
    return tm_budget                               # pad DHW up to a multiple of tm


# -------- Pass 1: input (X) statistics on the MXU: Gram matrix + lane sums --------
def _x_stats_kernel(x_ref, gram_ref, sum_ref):
    mi = pl.program_id(2)

    @pl.when(mi == 0)
    def _init():
        gram_ref[...] = jnp.zeros_like(gram_ref)
        sum_ref[...] = jnp.zeros_like(sum_ref)

    xt = x_ref[...]                                       # (Cin, tm), native dtype
    # S += X @ X^T  (contract over the tm lanes) -> (Cin, Cin), f32 accumulation.
    gram_ref[...] += lax.dot_general(
        xt, xt, (((1,), (1,)), ((), ())),
        preferred_element_type=jnp.float32)
    # sum_x += sum over lanes of X -> (Cin, 1); cast first so accumulation is f32.
    sum_ref[...] += jnp.sum(xt.astype(jnp.float32), axis=1, keepdims=True)


# -------- Pass 2: recompute conv with folded BN scale, add bias, ReLU --------
def _conv_bn_relu_kernel(w_ref, b_ref, x_ref, o_ref):
    # Y = (scale*W) @ X recomputed from the X tile (MXU otherwise idle) instead of
    # reading a conv output back from HBM; the only large HBM write is the output.
    y = jnp.dot(w_ref[...], x_ref[...], preferred_element_type=jnp.float32)
    o_ref[...] = jnp.maximum(y + b_ref[...], 0.0).astype(o_ref.dtype)


def conv_block2(x, w, gamma, beta):
    """x: (N, Cin, D, H, W); w: (Cout, Cin, 1, 1, 1); gamma/beta: (Cout,)."""
    N, Cin, D, H, W = x.shape
    Cout = w.shape[0]
    assert w.shape[1] == Cin and w.shape[2:] == (1, 1, 1), "kernel_size=1 only"

    DHW = D * H * W
    M = N * DHW                          # true sample count (padding excluded)
    f32 = jnp.float32
    xbytes = x.dtype.itemsize

    # ---- Per-generation VMEM budget ----
    try:
        phys = int(getattr(pltpu.get_tpu_info(), "vmem_capacity_bytes", 64 * _MiB))
    except Exception:
        phys = 64 * _MiB                 # conservative fallback (v7x-sized)
    cap = 48 * _MiB if phys <= 64 * _MiB else 96 * _MiB

    # ---- Budget-derived lane tile: streamed working set ~ 2*(Cin+Cout)*tm bytes ----
    resident = 4 * (Cout * Cin + Cout) + 8 * (Cin * Cin + Cin)
    per_lane = max(1, 2 * (Cin + Cout) * xbytes)
    tm_budget = max(_LANES, (cap // 2 - resident) // per_lane)
    tm_budget = min(tm_budget, 16384)
    tm = _pick_tile(DHW, tm_budget)

    DHW_pad = _round_up(DHW, tm)
    n_m = DHW_pad // tm

    # NCDHW is contiguous as (N, Cin, DHW): metadata-only reshape, NO dtype cast
    # (stream X in its native dtype -> halves HBM traffic when x is bf16).
    x3 = x.reshape(N, Cin, DHW)
    if DHW_pad != DHW:
        x3 = jnp.pad(x3, ((0, 0), (0, 0), (0, DHW_pad - DHW)))   # lane-dense tiles

    # Extra parallel split of the m sweep so both v7x TensorCores work when N == 1.
    n_par = 2 if (N == 1 and n_m >= 2 and n_m % 2 == 0) else 1
    m_inner = n_m // n_par

    w2f = w.reshape(Cout, Cin).astype(f32)

    # 1.5x headroom on the real need, floored at the default scoped size, capped
    # per generation (v7x: leave room for Mosaic internal scratch below 64 MiB).
    need = (resident
            + 2 * Cin * tm * xbytes              # streamed X tiles (double-buffered)
            + 2 * Cout * tm * xbytes)            # streamed output tiles (pass 2)
    vmem_limit = int(min(cap, max(32 * _MiB, int(1.5 * need))))

    # ---- Pass 1: per-(n, split) partial X statistics ----
    grams, sums = pl.pallas_call(
        _x_stats_kernel,
        out_shape=(
            jax.ShapeDtypeStruct((N * n_par, Cin, Cin), f32),
            jax.ShapeDtypeStruct((N * n_par, Cin, 1), f32),
        ),
        grid=(N, n_par, m_inner),
        in_specs=[
            pl.BlockSpec((pl.Squeezed(), Cin, tm),
                         lambda n, p, m: (n, 0, p * m_inner + m)),
        ],
        out_specs=(
            pl.BlockSpec((pl.Squeezed(), Cin, Cin),
                         lambda n, p, m: (n * n_par + p, 0, 0)),
            pl.BlockSpec((pl.Squeezed(), Cin, 1),
                         lambda n, p, m: (n * n_par + p, 0, 0)),
        ),
        compiler_params=pltpu.CompilerParams(
            dimension_semantics=("parallel", "parallel", "arbitrary"),
            vmem_limit_bytes=vmem_limit,
        ),
    )(x3)

    # ---- Tiny per-channel glue: recover BN batch stats of Y, fold into the weight ----
    hp = lax.Precision.HIGHEST
    S = jnp.sum(grams, axis=0)                             # (Cin, Cin)
    sx = jnp.sum(sums, axis=0)[:, 0]                       # (Cin,)
    mean = jnp.dot(w2f, sx, precision=hp) / M              # (Cout,)   E[y]
    ws = jnp.dot(w2f, S, precision=hp)                     # (Cout, Cin)
    ey2 = jnp.sum(ws * w2f, axis=1) / M                    # (Cout,)   E[y^2]
    # Training-mode BN normalizes with the biased variance. E[y^2]-mean^2 can cancel
    # when |mean| >> std; clamp >= 0 (a shifted/Welford scheme would be more robust).
    var = jnp.maximum(ey2 - mean * mean, 0.0)
    scale = gamma.astype(f32) * lax.rsqrt(var + EPS)
    bias = beta.astype(f32) - mean * scale
    w_scaled = (w2f * scale[:, None]).astype(x.dtype)      # feed MXU in x's dtype
    bias2 = bias[:, None]                                  # (Cout, 1), f32

    # ---- Pass 2: recompute conv, fused BN affine + ReLU, single HBM output write ----
    out3 = pl.pallas_call(
        _conv_bn_relu_kernel,
        out_shape=jax.ShapeDtypeStruct((N, Cout, DHW_pad), x.dtype),
        grid=(N, n_m),
        in_specs=[
            pl.BlockSpec((Cout, Cin), lambda n, m: (0, 0)),                  # resident W
            pl.BlockSpec((Cout, 1), lambda n, m: (0, 0)),                    # resident bias
            pl.BlockSpec((pl.Squeezed(), Cin, tm), lambda n, m: (n, 0, m)),  # stream X
        ],
        out_specs=pl.BlockSpec((pl.Squeezed(), Cout, tm), lambda n, m: (n, 0, m)),
        compiler_params=pltpu.CompilerParams(
            dimension_semantics=("parallel", "parallel"),
            vmem_limit_bytes=vmem_limit,
        ),
    )(w_scaled, bias2, x3)

    if DHW_pad != DHW:
        out3 = out3[:, :, :DHW]
    # (N, Cout, DHW) -> NCDHW is a metadata-only reshape (no transpose).
    return out3.reshape(N, Cout, D, H, W)


def conv_block2_reference(x, w, gamma, beta):
    """Pure-JAX reference mirroring the PyTorch forward (training-mode BN)."""
    y = jnp.einsum("oc,ncdhw->nodhw", w.reshape(w.shape[0], w.shape[1]), x,
                   precision=lax.Precision.HIGHEST)
    mean = y.mean(axis=(0, 2, 3, 4), keepdims=True)
    var = y.var(axis=(0, 2, 3, 4), keepdims=True)      # biased, like BN normalization
    yn = (y - mean) / jnp.sqrt(var + EPS)
    yn = yn * gamma[None, :, None, None, None] + beta[None, :, None, None, None]
    return jnp.maximum(yn, 0.0)


if __name__ == "__main__":
    key = jax.random.PRNGKey(0)
    kx, kw = jax.random.split(key)

    N, Cin, Cout, D, H, Wd = 2, 4, 8, 16, 16, 16
    x = jax.random.normal(kx, (N, Cin, D, H, Wd), dtype=jnp.float32)
    # Conv3d weight shape (Cout, Cin, 1, 1, 1); deterministic synthetic init.
    w = jax.random.normal(kw, (Cout, Cin, 1, 1, 1), dtype=jnp.float32) * 0.1
    # BatchNorm3d default init: gamma = 1, beta = 0.
    gamma = jnp.ones((Cout,), dtype=jnp.float32)
    beta = jnp.zeros((Cout,), dtype=jnp.float32)

    out = jax.block_until_ready(conv_block2(x, w, gamma, beta))

    ref = conv_block2_reference(x, w, gamma, beta)
    assert out.shape == (N, Cout, D, H, Wd)
    assert jnp.allclose(out, ref, atol=2e-3, rtol=2e-3), "mismatch vs JAX reference"

    print("KERNEL_OK")
</pallas_src>

<mosaic_0001>
module attributes {stable_mosaic.version = 11 : i64} {
  func.func @_x_stats_kernel(%arg0: i32, %arg1: i32, %arg2: i32, %arg3: memref<1x4x4096xf32, #tpu.memory_space<vmem>>, %arg4: memref<1x4x4xf32, #tpu.memory_space<vmem>>, %arg5: memref<1x4x1xf32, #tpu.memory_space<vmem>>) attributes {dimension_semantics = [#tpu.dimension_semantics<parallel>, #tpu.dimension_semantics<parallel>, #tpu.dimension_semantics<arbitrary>], iteration_bounds = array<i64: 2, 1, 1>, scalar_prefetch = 0 : i64, scratch_operands = 0 : i64, tpu.core_type = #tpu.core_type<tc>, window_params = [{transform_indices = @transform_0, window_bounds = array<i64: 1, 4, 4096>}, {transform_indices = @transform_1, window_bounds = array<i64: 1, 4, 4>}, {transform_indices = @transform_2, window_bounds = array<i64: 1, 4, 1>}]} {
    %c0_i32 = arith.constant 0 : i32
    %0 = arith.cmpi eq, %arg2, %c0_i32 : i32
    %1 = arith.extui %0 : i1 to i32
    %c0_i32_0 = arith.constant 0 : i32
    %2 = arith.cmpi ne, %1, %c0_i32_0 : i32
    scf.if %2 {
      %cst_16 = arith.constant 0.000000e+00 : f32
      %20 = vector.broadcast %cst_16 : f32 to vector<4x4xf32>
      %c0_17 = arith.constant 0 : index
      %c0_18 = arith.constant 0 : index
      %c0_19 = arith.constant 0 : index
      %21 = vector.load %arg4[%c0_17, %c0_18, %c0_19] : memref<1x4x4xf32, #tpu.memory_space<vmem>>, vector<1x4x4xf32>
      %22 = vector.shape_cast %21 : vector<1x4x4xf32> to vector<4x4xf32>
      %23 = vector.shape_cast %20 : vector<4x4xf32> to vector<1x4x4xf32>
      tpu.vector_store %arg4[%c0_17, %c0_18, %c0_19], %23 {strides = array<i32>} : memref<1x4x4xf32, #tpu.memory_space<vmem>>, vector<1x4x4xf32>,
      %cst_20 = arith.constant 0.000000e+00 : f32
      %24 = vector.broadcast %cst_20 : f32 to vector<4x1xf32>
      %c0_21 = arith.constant 0 : index
      %c0_22 = arith.constant 0 : index
      %c0_23 = arith.constant 0 : index
      %25 = vector.load %arg5[%c0_21, %c0_22, %c0_23] : memref<1x4x1xf32, #tpu.memory_space<vmem>>, vector<1x4x1xf32>
      %26 = vector.shape_cast %25 : vector<1x4x1xf32> to vector<4x1xf32>
      %27 = vector.shape_cast %24 : vector<4x1xf32> to vector<1x4x1xf32>
      tpu.vector_store %arg5[%c0_21, %c0_22, %c0_23], %27 {strides = array<i32>} : memref<1x4x1xf32, #tpu.memory_space<vmem>>, vector<1x4x1xf32>,
    } else {
    }
    %c0 = arith.constant 0 : index
    %c0_1 = arith.constant 0 : index
    %c0_2 = arith.constant 0 : index
    %3 = vector.load %arg3[%c0, %c0_1, %c0_2] : memref<1x4x4096xf32, #tpu.memory_space<vmem>>, vector<1x4x4096xf32>
    %4 = vector.shape_cast %3 : vector<1x4x4096xf32> to vector<4x4096xf32>
    %c0_3 = arith.constant 0 : index
    %c0_4 = arith.constant 0 : index
    %c0_5 = arith.constant 0 : index
    %5 = vector.load %arg4[%c0_3, %c0_4, %c0_5] : memref<1x4x4xf32, #tpu.memory_space<vmem>>, vector<1x4x4xf32>
    %6 = vector.shape_cast %5 : vector<1x4x4xf32> to vector<4x4xf32>
    %cst = arith.constant dense<0.000000e+00> : vector<4x4xf32>
    %7 = tpu.matmul %4, %4, %cst {dimension_numbers = #tpu.dot_dimension_numbers<[1], [1], [0], [0], [0, 0, 1, 0], [], []>} : vector<4x4096xf32>, vector<4x4096xf32>, vector<4x4xf32> -> vector<4x4xf32>
    %8 = arith.addf %6, %7 : vector<4x4xf32>
    %c0_6 = arith.constant 0 : index
    %c0_7 = arith.constant 0 : index
    %c0_8 = arith.constant 0 : index
    %9 = vector.load %arg4[%c0_6, %c0_7, %c0_8] : memref<1x4x4xf32, #tpu.memory_space<vmem>>, vector<1x4x4xf32>
    %10 = vector.shape_cast %9 : vector<1x4x4xf32> to vector<4x4xf32>
    %11 = vector.shape_cast %8 : vector<4x4xf32> to vector<1x4x4xf32>
    tpu.vector_store %arg4[%c0_6, %c0_7, %c0_8], %11 {strides = array<i32>} : memref<1x4x4xf32, #tpu.memory_space<vmem>>, vector<1x4x4xf32>,
    %c0_9 = arith.constant 0 : index
    %c0_10 = arith.constant 0 : index
    %c0_11 = arith.constant 0 : index
    %12 = vector.load %arg5[%c0_9, %c0_10, %c0_11] : memref<1x4x1xf32, #tpu.memory_space<vmem>>, vector<1x4x1xf32>
    %13 = vector.shape_cast %12 : vector<1x4x1xf32> to vector<4x1xf32>
    %cst_12 = arith.constant dense<0.000000e+00> : vector<4xf32>
    %14 = vector.multi_reduction <add>, %4, %cst_12 [1] : vector<4x4096xf32> to vector<4xf32>
    %15 = vector.shape_cast %14 : vector<4xf32> to vector<4x1xf32>
    %16 = arith.addf %13, %15 : vector<4x1xf32>
    %c0_13 = arith.constant 0 : index
    %c0_14 = arith.constant 0 : index
    %c0_15 = arith.constant 0 : index
    %17 = vector.load %arg5[%c0_13, %c0_14, %c0_15] : memref<1x4x1xf32, #tpu.memory_space<vmem>>, vector<1x4x1xf32>
    %18 = vector.shape_cast %17 : vector<1x4x1xf32> to vector<4x1xf32>
    %19 = vector.shape_cast %16 : vector<4x1xf32> to vector<1x4x1xf32>
    tpu.vector_store %arg5[%c0_13, %c0_14, %c0_15], %19 {strides = array<i32>} : memref<1x4x1xf32, #tpu.memory_space<vmem>>, vector<1x4x1xf32>,
    return
  }
  func.func @transform_0(%arg0: i32, %arg1: i32, %arg2: i32) -> (i32, i32, i32) {
    %c1_i32 = arith.constant 1 : i32
    %0 = arith.muli %arg1, %c1_i32 : i32
    %1 = arith.addi %0, %arg2 : i32
    %c0_i32 = arith.constant 0 : i32
    %c0_i32_0 = arith.constant 0 : i32
    return %arg0, %c0_i32, %1 : i32, i32, i32
  }
  func.func @transform_1(%arg0: i32, %arg1: i32, %arg2: i32) -> (i32, i32, i32) {
    %c1_i32 = arith.constant 1 : i32
    %0 = arith.muli %arg0, %c1_i32 : i32
    %1 = arith.addi %0, %arg1 : i32
    %c0_i32 = arith.constant 0 : i32
    %c0_i32_0 = arith.constant 0 : i32
    %c0_i32_1 = arith.constant 0 : i32
    return %1, %c0_i32, %c0_i32_0 : i32, i32, i32
  }
  func.func @transform_2(%arg0: i32, %arg1: i32, %arg2: i32) -> (i32, i32, i32) {
    %c1_i32 = arith.constant 1 : i32
    %0 = arith.muli %arg0, %c1_i32 : i32
    %1 = arith.addi %0, %arg1 : i32
    %c0_i32 = arith.constant 0 : i32
    %c0_i32_0 = arith.constant 0 : i32
    %c0_i32_1 = arith.constant 0 : i32
    return %1, %c0_i32, %c0_i32_0 : i32, i32, i32
  }
}

</mosaic_0001>

<llo_original>
// kernel: tpu_custom_call.1
$region0: #{tpu_custom_call.1}
  #allocation0 [shape = 'u32[]', space=smem, size = 0x4, offset = 0x4, fixed_abs, tag = 'smem constant byte address 0x4 - core index']
  #allocation1 [shape = 'u32[144,128]{1,0:T(1,128)}', space=vmem, size = 0x12000, scoped, tag = 'internal scratch']
  %s0 = inlined_call_operand.hbm [shape: f32[2,4,4096], index: 0, kind: input, shape index: {}]
  %s1 = inlined_call_operand.hbm [shape: f32[2,4,4], index: 1, kind: output, shape index: {0}]
  %s2 = inlined_call_operand.vmem [shape: f32[2,4,1], index: 2, kind: output, shape index: {1}]
  %3 = xla_tuple %s1, %s2
  %s4 = sld [smem:[#allocation0]]
  $region53: #{tpu_custom_call.1} parent=0
    _
  %s6 = ssub.s32 1, %s4
  %s7 = scalar_select 0, %s6, %s4
  $region1: #{tpu_custom_call.1} parent=0
    #allocation2 [shape = 'u8[131072]{0}', space=vmem, size = 0x20000, scoped, tag = 'input window, operand 0']
    #allocation3 [shape = 's32[2]{0}', space=sflag, size = 0x8, scoped, tag = 'scoped memory for tpu_custom_call.1']
    #allocation4 [shape = 's32[2]{0}', space=sflag, size = 0x8, scoped, tag = 'scoped memory for tpu_custom_call.1']
    #allocation5 [shape = 'u8[4096]{0}', space=vmem, size = 0x1000, scoped, tag = 'output window, operand 0']
    %8 = vsyncpa [#allocation3], 0
    %s9 = scalar_lea.sflag [#allocation3], 1
    %10 = vsyncpa %s9, 0
    %11 = vsyncpa [#allocation4], 0
    %s12 = scalar_lea.sflag [#allocation4], 1
    %13 = vsyncpa %s12, 0
    loop: start=0, step=1, limit=4
    $region2: #{tpu_custom_call.1} parent=1 // loop_pre_header
      _
    $region3: #{tpu_custom_call.1} parent=1 // loop_header
      %s15 = sphi 0, %s19
      %p16 = scmp.ge.s32.totalorder %s15, 4
      %s22 = sphi 0, %s41
      %s23 = sphi 0, %s37
      %s24 = sphi 0, %s33
      %s25 = sphi 0, %s22
      %s26 = sphi 0, %s23
      %s27 = sphi 0, %s24
      %s28 = sphi 0, %s25
      %s29 = sphi 0, %s26
      %s30 = sphi 0, %s27
      %s48 = sphi 0, %s50
      %s51 = sphi 0, %s48
      %s52 = sphi 0, %s51
      %s68 = sphi 0, %s52
      %s76 = sphi 0, %s78
      %s79 = sphi 0, %s76
      %s80 = sphi 0, %s79
      %s96 = sphi 0, %s80
      %s104 = sphi 0, %s106
      %s107 = sphi 0, %s104
      %s108 = sphi 0, %s107
      %s124 = sphi 0, %s108
    $region4: #{tpu_custom_call.1} parent=1 // loop_header_branch
      %18 = sbr.rel (%p16) target = $region8
    $region5: #{tpu_custom_call.1} parent=1 // loop_body
      %s20 = ssub.s32 %s15, 1
      %s21 = ssub.s32 %s15, 2
      %s31 = sadd.s32 1, %s24
      %p32 = scmp.ge.s32.totalorder %s31, 1
      %s33 = scalar_select %p32, 0, %s31
      %s34 = sadd.s32 1, %s23
      %s35 = scalar_select %p32, %s34, %s23
      %p36 = scmp.ge.s32.totalorder %s35, 1
      %s37 = scalar_select %p36, 0, %s35
      %s38 = sadd.s32 1, %s22
      %s39 = scalar_select %p36, %s38, %s22
      %p40 = scmp.ge.s32.totalorder %s39, 2
      %s41 = scalar_select %p40, 0, %s39
      %s42 = sadd.s32 %s23, %s24
      %s43 = sadd.s32 %s37, %s33
      %s44 = ssub.s32 %s22, %s41
      %s45 = ssub.s32 %s42, %s43
      %s46 = sor.u32 %s44, %s45
      %p47 = scmp.eq.s32.totalorder %s46, 0
      %s49 = sadd.s32 %s48, 1
      %s50 = scalar_select %p47, %s48, %s49
      %p53 = pneg %p47
      %p54 = scmp.eq.s32.totalorder %s15, 1
      %p55 = por %p53, %p54
      %p56 = scmp.ne.s32.totalorder %s48, %s51
      %p57 = scmp.eq.s32.totalorder %s15, 0
      %p58 = por %p56, %p57
      %p59 = scmp.ne.s32.totalorder %s48, %s51
      %p60 = scmp.eq.s32.totalorder %s20, 1
      %p61 = por %p59, %p60
      %p62 = scmp.ne.s32.totalorder %s51, %s52
      %p63 = scmp.eq.s32.totalorder %s20, 0
      %p64 = por %p62, %p63
      %p65 = scmp.ne.s32.totalorder %s51, %s52
      %p66 = scmp.eq.s32.totalorder %s21, 1
      %p67 = por %p65, %p66
      %p69 = scmp.ne.s32.totalorder %s52, %s68
      %p70 = scmp.eq.s32.totalorder %s21, 0
      %p71 = por %p69, %p70
      %s72 = sadd.s32 %s22, %s23
      %s73 = sadd.s32 %s41, %s37
      %s74 = ssub.s32 %s72, %s73
      %p75 = scmp.eq.s32.totalorder %s74, 0
      %s77 = sadd.s32 %s76, 1
      %s78 = scalar_select %p75, %s76, %s77
      %p81 = pneg %p75
      %p82 = scmp.eq.s32.totalorder %s15, 1
      %p83 = por %p81, %p82
      %p84 = scmp.ne.s32.totalorder %s76, %s79
      %p85 = scmp.eq.s32.totalorder %s15, 0
      %p86 = por %p84, %p85
      %p87 = scmp.ne.s32.totalorder %s76, %s79
      %p88 = scmp.eq.s32.totalorder %s20, 1
      %p89 = por %p87, %p88
      %p90 = scmp.ne.s32.totalorder %s79, %s80
      %p91 = scmp.eq.s32.totalorder %s20, 0
      %p92 = por %p90, %p91
      %p93 = scmp.ne.s32.totalorder %s79, %s80
      %p94 = scmp.eq.s32.totalorder %s21, 1
      %p95 = por %p93, %p94
      %p97 = scmp.ne.s32.totalorder %s80, %s96
      %p98 = scmp.eq.s32.totalorder %s21, 0
      %p99 = por %p97, %p98
      %s100 = sadd.s32 %s22, %s23
      %s101 = sadd.s32 %s41, %s37
      %s102 = ssub.s32 %s100, %s101
      %p103 = scmp.eq.s32.totalorder %s102, 0
      %s105 = sadd.s32 %s104, 1
      %s106 = scalar_select %p103, %s104, %s105
      %p109 = pneg %p103
      %p110 = scmp.eq.s32.totalorder %s15, 1
      %p111 = por %p109, %p110
      %p112 = scmp.ne.s32.totalorder %s104, %s107
      %p113 = scmp.eq.s32.totalorder %s15, 0
      %p114 = por %p112, %p113
      %p115 = scmp.ne.s32.totalorder %s104, %s107
      %p116 = scmp.eq.s32.totalorder %s20, 1
      %p117 = por %p115, %p116
      %p118 = scmp.ne.s32.totalorder %s107, %s108
      %p119 = scmp.eq.s32.totalorder %s20, 0
      %p120 = por %p118, %p119
      %p121 = scmp.ne.s32.totalorder %s107, %s108
      %p122 = scmp.eq.s32.totalorder %s21, 1
      %p123 = por %p121, %p122
      %p125 = scmp.ne.s32.totalorder %s108, %s124
      %p126 = scmp.eq.s32.totalorder %s21, 0
      %p127 = por %p125, %p126
      %p128 = scmp.le.s32.totalorder 1, %s15
      %p129 = scmp.lt.s32.totalorder %s15, 3
      %p130 = pnand %p128, %p129
      %p131 = pneg %p130
      // Predicated region
      $region9: #{tpu_custom_call.1} parent=5 // pred_check
        _
      $region10: #{tpu_custom_call.1} parent=5 // pred_check_branch
        %133 = sbr.rel (%p130) target = $region12
      $region11: #{tpu_custom_call.1} parent=5 // pred_region
        %s134 = ssub.s32 %s15, 1
      $region12: #{tpu_custom_call.1} parent=5 // pred_fallthru
        _
      %p135 = scmp.lt.s32.totalorder %s15, 2
      // Predicated region
      $region13: #{tpu_custom_call.1} parent=5 // pred_check
        %p136 = pneg %p135
      $region14: #{tpu_custom_call.1} parent=5 // pred_check_branch
        %138 = sbr.rel (%p136) target = $region16
      $region15: #{tpu_custom_call.1} parent=5 // pred_region
        // Predicated region
        $region17: #{tpu_custom_call.1} parent=15 // pred_check
          %p139 = pneg %p58
        $region18: #{tpu_custom_call.1} parent=15 // pred_check_branch
          %141 = sbr.rel (%p139) target = $region20
        $region19: #{tpu_custom_call.1} parent=15 // pred_region
          %s142 = sand.u32 %s48, 1
          %s143 = scalar_lea.sflag [#allocation3], %s142
          %s144 = sand.u32 %s48, 1
          %s145 = smul.addr %s144, 128
          %s146 = scalar_lea.vmem [#allocation2], %s145
          %s147 = sadd.s32 %s23, %s24
          %s148 = smul.u32 32, %s147
          %s150 = ssub.s32 2048, 2048
          %151 = vsyncadd %s143, %s150
          %s152 = smul.addr %s22, 32
          %s153 = sadd.s32 %s148, %s152
          %s154 = smul.addr %s153, 64
          %s155 = scalar_lea.hbm %s0, %s154
          %s157 = sshll.u32 %s146, 4
          %s158 = int_to_ptr.vmem [resolvable:$true] %s157
          %160 = dma.hbm_to_vmem [thread:$0]  %s155, 2048, %s158, %s143
        $region20: #{tpu_custom_call.1} parent=15 // pred_fallthru
          _
      $region16: #{tpu_custom_call.1} parent=5 // pred_fallthru
        _
      %p161 = scmp.le.s32.totalorder 1, %s15
      %p162 = scmp.lt.s32.totalorder %s15, 3
      %p163 = pnand %p161, %p162
      %p164 = pneg %p163
      // Predicated region
      $region21: #{tpu_custom_call.1} parent=5 // pred_check
        _
      $region22: #{tpu_custom_call.1} parent=5 // pred_check_branch
        %166 = sbr.rel (%p163) target = $region24
      $region23: #{tpu_custom_call.1} parent=5 // pred_region
        %s167 = ssub.s32 %s15, 1
        %s168 = sand.u32 %s51, 1
        %s169 = scalar_lea.sflag [#allocation3], %s168
        %s170 = sand.u32 %s51, 1
        %s171 = smul.addr %s170, 128
        %s172 = scalar_lea.vmem [#allocation2], %s171
        // Predicated region
        $region25: #{tpu_custom_call.1} parent=23 // pred_check
          %p173 = pneg %p64
        $region26: #{tpu_custom_call.1} parent=23 // pred_check_branch
          %175 = sbr.rel (%p173) target = $region28
        $region27: #{tpu_custom_call.1} parent=23 // pred_region
          %176 = dma.done %s169, 2048
        $region28: #{tpu_custom_call.1} parent=23 // pred_fallthru
          _
        %s177 = sand.u32 %s51, 1
        %s178 = scalar_lea.sflag [#allocation3], %s177
        %s179 = sand.u32 %s51, 1
        %s180 = smul.addr %s179, 128
        %s181 = scalar_lea.vmem [#allocation2], %s180
        %p182 = pneg %p64
        %p183 = pneg %p61
        %p184 = pneg %p92
        %p185 = pneg %p89
        %s186 = sand.u32 %s79, 1
        %s187 = scalar_lea.sflag [#allocation4], %s186
        %s188 = sand.u32 %s79, 1
        %s189 = smul.addr %s188, 4
        %s190 = scalar_lea.vmem [#allocation5], %s189
        %p191 = pneg %p120
        %p192 = pneg %p117
        %s193 = sadd.s32 %s25, %s26
        %p194 = scmp.lt.s32.totalorder %s193, 1
        %s195 = scalar_select %p194, %s193, 1
        %s196 = smul.addr %s195, 4
        %s197 = scalar_lea.vmem %s2, %s196
        %s198 = sadd.s32 %s26, %s27
        %s199 = smul.u32 32, %s198
        %s200 = sadd.s32 %s25, %s26
        %s201 = sadd.s32 %s25, %s26
        %p202 = scmp.lt.s32.totalorder %s201, 1
        %s203 = scalar_select %p202, %s201, 1
        %s204 = smul.addr %s203, 4
        %s205 = scalar_lea.vmem %s2, %s204
        %s206 = sadd.s32 %s25, %s26
        %p207 = scmp.eq.s32.totalorder %s27, 0
        // Predicated region
        $region29: #{tpu_custom_call.1} parent=23 // pred_check
          %p208 = pneg %p207
        $region30: #{tpu_custom_call.1} parent=23 // pred_check_branch
          %210 = sbr.rel (%p208) target = $region32
        $region31: #{tpu_custom_call.1} parent=23 // pred_region
          %vm211 = vcmask 27648
          %212 = vst.msk [vmem:[%s190] sm:$0xf] %vm211, 0.0
          %vm213 = vcmask 3072
          %214 = vst.msk [vmem:[%s205] sm:$0xf] %vm213, 0.0
        $region32: #{tpu_custom_call.1} parent=23 // pred_fallthru
          _
        %v215 = vld [vmem:[%s172] sm:$0xff]
        %v216 = vld [vmem:[%s172 + $0x8] sm:$0xff]
        %v217 = vld [vmem:[%s172 + $0x10] sm:$0xff]
        %v218 = vld [vmem:[%s172 + $0x18] sm:$0xff]
        %v219 = vld [vmem:[%s172 + $0x20] sm:$0xff]
        %v220 = vld [vmem:[%s172 + $0x28] sm:$0xff]
        %v221 = vld [vmem:[%s172 + $0x30] sm:$0xff]
        %v222 = vld [vmem:[%s172 + $0x38] sm:$0xff]
        %v223 = vld [vmem:[%s172 + $0x40] sm:$0xff]
        %v224 = vld [vmem:[%s172 + $0x48] sm:$0xff]
        %v225 = vld [vmem:[%s172 + $0x50] sm:$0xff]
        %v226 = vld [vmem:[%s172 + $0x58] sm:$0xff]
        %v227 = vld [vmem:[%s172 + $0x60] sm:$0xff]
        %v228 = vld [vmem:[%s172 + $0x68] sm:$0xff]
        %v229 = vld [vmem:[%s172 + $0x70] sm:$0xff]
        %v230 = vld [vmem:[%s172 + $0x78] sm:$0xff]
        %v231 = vld [vmem:[%s190] sm:$0xf]
        %v248 = vcombine.high %v215, %v215
        %v249 = vcombine.high %v216, %v216
        %v250 = vcombine.high %v217, %v217
        %v251 = vcombine.high %v218, %v218
        %v252 = vcombine.high %v219, %v219
        %v253 = vcombine.high %v220, %v220
        %v254 = vcombine.high %v221, %v221
        %v255 = vcombine.high %v222, %v222
        %v256 = vcombine.high %v223, %v223
        %v257 = vcombine.high %v224, %v224
        %v258 = vcombine.high %v225, %v225
        %v259 = vcombine.high %v226, %v226
        %v260 = vcombine.high %v227, %v227
        %v261 = vcombine.high %v228, %v228
        %v262 = vcombine.high %v229, %v229
        %v263 = vcombine.high %v230, %v230
        %280 = vmatprep.subr.mxu0 %v248
        %281 = vmatpush1.xpose.msra.mxu0 %v215
        %282 = vmatprep.subr.mxu0 0.0
        %283 = vmatpush1.xpose.msra.mxu0 0.0
        %284 = vmatprep.subr.mxu0 0.0
        %285 = vmatpush1.xpose.msra.mxu0 0.0
        %286 = vmatprep.subr.mxu0 0.0
        %287 = vmatpush1.xpose.msra.mxu0 0.0
        %288 = vmatprep.subr.mxu0 0.0
        %289 = vmatpush1.xpose.msra.mxu0 0.0
        %290 = vmatprep.subr.mxu0 0.0
        %291 = vmatpush1.xpose.msra.mxu0 0.0
        %292 = vmatprep.subr.mxu0 0.0
        %293 = vmatpush1.xpose.msra.mxu0 0.0
        %294 = vmatprep.subr.mxu0 0.0
        %295 = vmatpush1.xpose.msra.mxu0 0.0
        %296 = vmatprep.subr.mxu0 0.0
        %297 = vmatpush1.xpose.msra.mxu0 0.0
        %298 = vmatprep.subr.mxu0 0.0
        %299 = vmatpush1.xpose.msra.mxu0 0.0
        %300 = vmatprep.subr.mxu0 0.0
        %301 = vmatpush1.xpose.msra.mxu0 0.0
        %302 = vmatprep.subr.mxu0 0.0
        %303 = vmatpush1.xpose.msra.mxu0 0.0
        %304 = vmatprep.subr.mxu0 0.0
        %305 = vmatpush1.xpose.msra.mxu0 0.0
        %306 = vmatprep.subr.mxu0 0.0
        %307 = vmatpush1.xpose.msra.mxu0 0.0
        %308 = vmatprep.subr.mxu0 0.0
        %309 = vmatpush1.xpose.msra.mxu0 0.0
        %310 = vmatprep.subr.mxu0 0.0
        %311 = vmatpush1.xpose.msra.mxu0 0.0
        %312 = vmatprep.subr.mxu0 0.0
        %313 = vmatpush1.xpose.msra.mxu0 0.0
        %314 = vmatprep.subr.mxu0 0.0
        %315 = vmatpush1.xpose.msra.mxu0 0.0
        %316 = vmatprep.subr.mxu0 0.0
        %317 = vmatpush1.xpose.msra.mxu0 0.0
        %318 = vmatprep.subr.mxu0 0.0
        %319 = vmatpush1.xpose.msra.mxu0 0.0
        %320 = vmatprep.subr.mxu0 0.0
        %321 = vmatpush1.xpose.msra.mxu0 0.0
        %322 = vmatprep.subr.mxu0 0.0
        %323 = vmatpush1.xpose.msra.mxu0 0.0
        %324 = vmatprep.subr.mxu0 0.0
        %325 = vmatpush1.xpose.msra.mxu0 0.0
        %326 = vmatprep.subr.mxu0 0.0
        %327 = vmatpush1.xpose.msra.mxu0 0.0
        %328 = vmatprep.subr.mxu0 0.0
        %329 = vmatpush1.xpose.msra.mxu0 0.0
        %330 = vmatprep.subr.mxu0 0.0
        %331 = vmatpush1.xpose.msra.mxu0 0.0
        %332 = vmatprep.subr.mxu0 0.0
        %333 = vmatpush1.xpose.msra.mxu0 0.0
        %334 = vmatprep.subr.mxu0 0.0
        %335 = vmatpush1.xpose.msra.mxu0 0.0
        %336 = vmatprep.subr.mxu0 0.0
        %337 = vmatpush1.xpose.msra.mxu0 0.0
        %338 = vmatprep.subr.mxu0 0.0
        %339 = vmatpush1.xpose.msra.mxu0 0.0
        %340 = vmatprep.subr.mxu0 0.0
        %341 = vmatpush1.xpose.msra.mxu0 0.0
        %342 = vmatprep.subr.mxu0 0.0
        %343 = vmatpush1.xpose.msra.mxu0 0.0
        %344 = vmatprep.mubr.f32.mxu0 %v248
        %345 = vmatmul.mubr.f32.gmra.mrb[0].mxu0 %v215
        %v346 = vpop.f32.mrb[0].mxu0
        %v347 = vadd.f32 0.0, %v346
        %v348 = vpop.f32.mrb[0].mxu0
        %349 = vdwg.mxu0
        %350 = vmatprep.subr.mxu0 %v249
        %351 = vmatpush1.xpose.msra.mxu0 %v216
        %352 = vmatprep.subr.mxu0 0.0
        %353 = vmatpush1.xpose.msra.mxu0 0.0
        %354 = vmatprep.subr.mxu0 0.0
        %355 = vmatpush1.xpose.msra.mxu0 0.0
        %356 = vmatprep.subr.mxu0 0.0
        %357 = vmatpush1.xpose.msra.mxu0 0.0
        %358 = vmatprep.subr.mxu0 0.0
        %359 = vmatpush1.xpose.msra.mxu0 0.0
        %360 = vmatprep.subr.mxu0 0.0
        %361 = vmatpush1.xpose.msra.mxu0 0.0
        %362 = vmatprep.subr.mxu0 0.0
        %363 = vmatpush1.xpose.msra.mxu0 0.0
        %364 = vmatprep.subr.mxu0 0.0
        %365 = vmatpush1.xpose.msra.mxu0 0.0
        %366 = vmatprep.subr.mxu0 0.0
        %367 = vmatpush1.xpose.msra.mxu0 0.0
        %368 = vmatprep.subr.mxu0 0.0
        %369 = vmatpush1.xpose.msra.mxu0 0.0
        %370 = vmatprep.subr.mxu0 0.0
        %371 = vmatpush1.xpose.msra.mxu0 0.0
        %372 = vmatprep.subr.mxu0 0.0
        %373 = vmatpush1.xpose.msra.mxu0 0.0
        %374 = vmatprep.subr.mxu0 0.0
        %375 = vmatpush1.xpose.msra.mxu0 0.0
        %376 = vmatprep.subr.mxu0 0.0
        %377 = vmatpush1.xpose.msra.mxu0 0.0
        %378 = vmatprep.subr.mxu0 0.0
        %379 = vmatpush1.xpose.msra.mxu0 0.0
        %380 = vmatprep.subr.mxu0 0.0
        %381 = vmatpush1.xpose.msra.mxu0 0.0
        %382 = vmatprep.subr.mxu0 0.0
        %383 = vmatpush1.xpose.msra.mxu0 0.0
        %384 = vmatprep.subr.mxu0 0.0
        %385 = vmatpush1.xpose.msra.mxu0 0.0
        %386 = vmatprep.subr.mxu0 0.0
        %387 = vmatpush1.xpose.msra.mxu0 0.0
        %388 = vmatprep.subr.mxu0 0.0
        %389 = vmatpush1.xpose.msra.mxu0 0.0
        %390 = vmatprep.subr.mxu0 0.0
        %391 = vmatpush1.xpose.msra.mxu0 0.0
        %392 = vmatprep.subr.mxu0 0.0
        %393 = vmatpush1.xpose.msra.mxu0 0.0
        %394 = vmatprep.subr.mxu0 0.0
        %395 = vmatpush1.xpose.msra.mxu0 0.0
        %396 = vmatprep.subr.mxu0 0.0
        %397 = vmatpush1.xpose.msra.mxu0 0.0
        %398 = vmatprep.subr.mxu0 0.0
        %399 = vmatpush1.xpose.msra.mxu0 0.0
        %400 = vmatprep.subr.mxu0 0.0
        %401 = vmatpush1.xpose.msra.mxu0 0.0
        %402 = vmatprep.subr.mxu0 0.0
        %403 = vmatpush1.xpose.msra.mxu0 0.0
        %404 = vmatprep.subr.mxu0 0.0
        %405 = vmatpush1.xpose.msra.mxu0 0.0
        %406 = vmatprep.subr.mxu0 0.0
        %407 = vmatpush1.xpose.msra.mxu0 0.0
        %408 = vmatprep.subr.mxu0 0.0
        %409 = vmatpush1.xpose.msra.mxu0 0.0
        %410 = vmatprep.subr.mxu0 0.0
        %411 = vmatpush1.xpose.msra.mxu0 0.0
        %412 = vmatprep.subr.mxu0 0.0
        %413 = vmatpush1.xpose.msra.mxu0 0.0
        %414 = vmatprep.mubr.f32.mxu0 %v249
        %415 = vmatmul.mubr.f32.gmra.mrb[0].mxu0 %v216
        %v416 = vpop.f32.mrb[0].mxu0
        %v417 = vadd.f32 %v347, %v416
        %v418 = vpop.f32.mrb[0].mxu0
        %419 = vdwg.mxu0
        %420 = vmatprep.subr.mxu0 %v250
        %421 = vmatpush1.xpose.msra.mxu0 %v217
        %422 = vmatprep.subr.mxu0 0.0
        %423 = vmatpush1.xpose.msra.mxu0 0.0
        %424 = vmatprep.subr.mxu0 0.0
        %425 = vmatpush1.xpose.msra.mxu0 0.0
        %426 = vmatprep.subr.mxu0 0.0
        %427 = vmatpush1.xpose.msra.mxu0 0.0
        %428 = vmatprep.subr.mxu0 0.0
        %429 = vmatpush1.xpose.msra.mxu0 0.0
        %430 = vmatprep.subr.mxu0 0.0
        %431 = vmatpush1.xpose.msra.mxu0 0.0
        %432 = vmatprep.subr.mxu0 0.0
        %433 = vmatpush1.xpose.msra.mxu0 0.0
        %434 = vmatprep.subr.mxu0 0.0
        %435 = vmatpush1.xpose.msra.mxu0 0.0
        %436 = vmatprep.subr.mxu0 0.0
        %437 = vmatpush1.xpose.msra.mxu0 0.0
        %438 = vmatprep.subr.mxu0 0.0
        %439 = vmatpush1.xpose.msra.mxu0 0.0
        %440 = vmatprep.subr.mxu0 0.0
        %441 = vmatpush1.xpose.msra.mxu0 0.0
        %442 = vmatprep.subr.mxu0 0.0
        %443 = vmatpush1.xpose.msra.mxu0 0.0
        %444 = vmatprep.subr.mxu0 0.0
        %445 = vmatpush1.xpose.msra.mxu0 0.0
        %446 = vmatprep.subr.mxu0 0.0
        %447 = vmatpush1.xpose.msra.mxu0 0.0
        %448 = vmatprep.subr.mxu0 0.0
        %449 = vmatpush1.xpose.msra.mxu0 0.0
        %450 = vmatprep.subr.mxu0 0.0
        %451 = vmatpush1.xpose.msra.mxu0 0.0
        %452 = vmatprep.subr.mxu0 0.0
        %453 = vmatpush1.xpose.msra.mxu0 0.0
        %454 = vmatprep.subr.mxu0 0.0
        %455 = vmatpush1.xpose.msra.mxu0 0.0
        %456 = vmatprep.subr.mxu0 0.0
        %457 = vmatpush1.xpose.msra.mxu0 0.0
        %458 = vmatprep.subr.mxu0 0.0
        %459 = vmatpush1.xpose.msra.mxu0 0.0
        %460 = vmatprep.subr.mxu0 0.0
        %461 = vmatpush1.xpose.msra.mxu0 0.0
        %462 = vmatprep.subr.mxu0 0.0
        %463 = vmatpush1.xpose.msra.mxu0 0.0
        %464 = vmatprep.subr.mxu0 0.0
        %465 = vmatpush1.xpose.msra.mxu0 0.0
        %466 = vmatprep.subr.mxu0 0.0
        %467 = vmatpush1.xpose.msra.mxu0 0.0
        %468 = vmatprep.subr.mxu0 0.0
        %469 = vmatpush1.xpose.msra.mxu0 0.0
        %470 = vmatprep.subr.mxu0 0.0
        %471 = vmatpush1.xpose.msra.mxu0 0.0
        %472 = vmatprep.subr.mxu0 0.0
        %473 = vmatpush1.xpose.msra.mxu0 0.0
        %474 = vmatprep.subr.mxu0 0.0
        %475 = vmatpush1.xpose.msra.mxu0 0.0
        %476 = vmatprep.subr.mxu0 0.0
        %477 = vmatpush1.xpose.msra.mxu0 0.0
        %478 = vmatprep.subr.mxu0 0.0
        %479 = vmatpush1.xpose.msra.mxu0 0.0
        %480 = vmatprep.subr.mxu0 0.0
        %481 = vmatpush1.xpose.msra.mxu0 0.0
        %482 = vmatprep.subr.mxu0 0.0
        %483 = vmatpush1.xpose.msra.mxu0 0.0
        %484 = vmatprep.mubr.f32.mxu0 %v250
        %485 = vmatmul.mubr.f32.gmra.mrb[0].mxu0 %v217
        %v486 = vpop.f32.mrb[0].mxu0
        %v487 = vadd.f32 %v417, %v486
        %v488 = vpop.f32.mrb[0].mxu0
        %489 = vdwg.mxu0
        %490 = vmatprep.subr.mxu0 %v251
        %491 = vmatpush1.xpose.msra.mxu0 %v218
        %492 = vmatprep.subr.mxu0 0.0
        %493 = vmatpush1.xpose.msra.mxu0 0.0
        %494 = vmatprep.subr.mxu0 0.0
        %495 = vmatpush1.xpose.msra.mxu0 0.0
        %496 = vmatprep.subr.mxu0 0.0
        %497 = vmatpush1.xpose.msra.mxu0 0.0
        %498 = vmatprep.subr.mxu0 0.0
        %499 = vmatpush1.xpose.msra.mxu0 0.0
        %500 = vmatprep.subr.mxu0 0.0
        %501 = vmatpush1.xpose.msra.mxu0 0.0
        %502 = vmatprep.subr.mxu0 0.0
        %503 = vmatpush1.xpose.msra.mxu0 0.0
        %504 = vmatprep.subr.mxu0 0.0
        %505 = vmatpush1.xpose.msra.mxu0 0.0
        %506 = vmatprep.subr.mxu0 0.0
        %507 = vmatpush1.xpose.msra.mxu0 0.0
        %508 = vmatprep.subr.mxu0 0.0
        %509 = vmatpush1.xpose.msra.mxu0 0.0
        %510 = vmatprep.subr.mxu0 0.0
        %511 = vmatpush1.xpose.msra.mxu0 0.0
        %512 = vmatprep.subr.mxu0 0.0
        %513 = vmatpush1.xpose.msra.mxu0 0.0
        %514 = vmatprep.subr.mxu0 0.0
        %515 = vmatpush1.xpose.msra.mxu0 0.0
        %516 = vmatprep.subr.mxu0 0.0
        %517 = vmatpush1.xpose.msra.mxu0 0.0
        %518 = vmatprep.subr.mxu0 0.0
        %519 = vmatpush1.xpose.msra.mxu0 0.0
        %520 = vmatprep.subr.mxu0 0.0
        %521 = vmatpush1.xpose.msra.mxu0 0.0
        %522 = vmatprep.subr.mxu0 0.0
        %523 = vmatpush1.xpose.msra.mxu0 0.0
        %524 = vmatprep.subr.mxu0 0.0
        %525 = vmatpush1.xpose.msra.mxu0 0.0
        %526 = vmatprep.subr.mxu0 0.0
        %527 = vmatpush1.xpose.msra.mxu0 0.0
        %528 = vmatprep.subr.mxu0 0.0
        %529 = vmatpush1.xpose.msra.mxu0 0.0
        %530 = vmatprep.subr.mxu0 0.0
        %531 = vmatpush1.xpose.msra.mxu0 0.0
        %532 = vmatprep.subr.mxu0 0.0
        %533 = vmatpush1.xpose.msra.mxu0 0.0
        %534 = vmatprep.subr.mxu0 0.0
        %535 = vmatpush1.xpose.msra.mxu0 0.0
        %536 = vmatprep.subr.mxu0 0.0
        %537 = vmatpush1.xpose.msra.mxu0 0.0
        %538 = vmatprep.subr.mxu0 0.0
        %539 = vmatpush1.xpose.msra.mxu0 0.0
        %540 = vmatprep.subr.mxu0 0.0
        %541 = vmatpush1.xpose.msra.mxu0 0.0
        %542 = vmatprep.subr.mxu0 0.0
        %543 = vmatpush1.xpose.msra.mxu0 0.0
        %544 = vmatprep.subr.mxu0 0.0
        %545 = vmatpush1.xpose.msra.mxu0 0.0
        %546 = vmatprep.subr.mxu0 0.0
        %547 = vmatpush1.xpose.msra.mxu0 0.0
        %548 = vmatprep.subr.mxu0 0.0
        %549 = vmatpush1.xpose.msra.mxu0 0.0
        %550 = vmatprep.subr.mxu0 0.0
        %551 = vmatpush1.xpose.msra.mxu0 0.0
        %552 = vmatprep.subr.mxu0 0.0
        %553 = vmatpush1.xpose.msra.mxu0 0.0
        %554 = vmatprep.mubr.f32.mxu0 %v251
        %555 = vmatmul.mubr.f32.gmra.mrb[0].mxu0 %v218
        %v556 = vpop.f32.mrb[0].mxu0
        %v557 = vadd.f32 %v487, %v556
        %v558 = vpop.f32.mrb[0].mxu0
        %559 = vdwg.mxu0
        %560 = vmatprep.subr.mxu0 %v252
        %561 = vmatpush1.xpose.msra.mxu0 %v219
        %562 = vmatprep.subr.mxu0 0.0
        %563 = vmatpush1.xpose.msra.mxu0 0.0
        %564 = vmatprep.subr.mxu0 0.0
        %565 = vmatpush1.xpose.msra.mxu0 0.0
        %566 = vmatprep.subr.mxu0 0.0
        %567 = vmatpush1.xpose.msra.mxu0 0.0
        %568 = vmatprep.subr.mxu0 0.0
        %569 = vmatpush1.xpose.msra.mxu0 0.0
        %570 = vmatprep.subr.mxu0 0.0
        %571 = vmatpush1.xpose.msra.mxu0 0.0
        %572 = vmatprep.subr.mxu0 0.0
        %573 = vmatpush1.xpose.msra.mxu0 0.0
        %574 = vmatprep.subr.mxu0 0.0
        %575 = vmatpush1.xpose.msra.mxu0 0.0
        %576 = vmatprep.subr.mxu0 0.0
        %577 = vmatpush1.xpose.msra.mxu0 0.0
        %578 = vmatprep.subr.mxu0 0.0
        %579 = vmatpush1.xpose.msra.mxu0 0.0
        %580 = vmatprep.subr.mxu0 0.0
        %581 = vmatpush1.xpose.msra.mxu0 0.0
        %582 = vmatprep.subr.mxu0 0.0
        %583 = vmatpush1.xpose.msra.mxu0 0.0
        %584 = vmatprep.subr.mxu0 0.0
        %585 = vmatpush1.xpose.msra.mxu0 0.0
        %586 = vmatprep.subr.mxu0 0.0
        %587 = vmatpush1.xpose.msra.mxu0 0.0
        %588 = vmatprep.subr.mxu0 0.0
        %589 = vmatpush1.xpose.msra.mxu0 0.0
        %590 = vmatprep.subr.mxu0 0.0
        %591 = vmatpush1.xpose.msra.mxu0 0.0
        %592 = vmatprep.subr.mxu0 0.0
        %593 = vmatpush1.xpose.msra.mxu0 0.0
        %594 = vmatprep.subr.mxu0 0.0
        %595 = vmatpush1.xpose.msra.mxu0 0.0
        %596 = vmatprep.subr.mxu0 0.0
        %597 = vmatpush1.xpose.msra.mxu0 0.0
        %598 = vmatprep.subr.mxu0 0.0
        %599 = vmatpush1.xpose.msra.mxu0 0.0
        %600 = vmatprep.subr.mxu0 0.0
        %601 = vmatpush1.xpose.msra.mxu0 0.0
        %602 = vmatprep.subr.mxu0 0.0
        %603 = vmatpush1.xpose.msra.mxu0 0.0
        %604 = vmatprep.subr.mxu0 0.0
        %605 = vmatpush1.xpose.msra.mxu0 0.0
        %606 = vmatprep.subr.mxu0 0.0
        %607 = vmatpush1.xpose.msra.mxu0 0.0
        %608 = vmatprep.subr.mxu0 0.0
        %609 = vmatpush1.xpose.msra.mxu0 0.0
        %610 = vmatprep.subr.mxu0 0.0
        %611 = vmatpush1.xpose.msra.mxu0 0.0
        %612 = vmatprep.subr.mxu0 0.0
        %613 = vmatpush1.xpose.msra.mxu0 0.0
        %614 = vmatprep.subr.mxu0 0.0
        %615 = vmatpush1.xpose.msra.mxu0 0.0
        %616 = vmatprep.subr.mxu0 0.0
        %617 = vmatpush1.xpose.msra.mxu0 0.0
        %618 = vmatprep.subr.mxu0 0.0
        %619 = vmatpush1.xpose.msra.mxu0 0.0
        %620 = vmatprep.subr.mxu0 0.0
        %621 = vmatpush1.xpose.msra.mxu0 0.0
        %622 = vmatprep.subr.mxu0 0.0
        %623 = vmatpush1.xpose.msra.mxu0 0.0
        %624 = vmatprep.mubr.f32.mxu0 %v252
        %625 = vmatmul.mubr.f32.gmra.mrb[0].mxu0 %v219
        %v626 = vpop.f32.mrb[0].mxu0
        %v627 = vadd.f32 %v557, %v626
        %v628 = vpop.f32.mrb[0].mxu0
        %629 = vdwg.mxu0
        %630 = vmatprep.subr.mxu0 %v253
        %631 = vmatpush1.xpose.msra.mxu0 %v220
        %632 = vmatprep.subr.mxu0 0.0
        %633 = vmatpush1.xpose.msra.mxu0 0.0
        %634 = vmatprep.subr.mxu0 0.0
        %635 = vmatpush1.xpose.msra.mxu0 0.0
        %636 = vmatprep.subr.mxu0 0.0
        %637 = vmatpush1.xpose.msra.mxu0 0.0
        %638 = vmatprep.subr.mxu0 0.0
        %639 = vmatpush1.xpose.msra.mxu0 0.0
        %640 = vmatprep.subr.mxu0 0.0
        %641 = vmatpush1.xpose.msra.mxu0 0.0
        %642 = vmatprep.subr.mxu0 0.0
        %643 = vmatpush1.xpose.msra.mxu0 0.0
        %644 = vmatprep.subr.mxu0 0.0
        %645 = vmatpush1.xpose.msra.mxu0 0.0
        %646 = vmatprep.subr.mxu0 0.0
        %647 = vmatpush1.xpose.msra.mxu0 0.0
        %648 = vmatprep.subr.mxu0 0.0
        %649 = vmatpush1.xpose.msra.mxu0 0.0
        %650 = vmatprep.subr.mxu0 0.0
        %651 = vmatpush1.xpose.msra.mxu0 0.0
        %652 = vmatprep.subr.mxu0 0.0
        %653 = vmatpush1.xpose.msra.mxu0 0.0
        %654 = vmatprep.subr.mxu0 0.0
        %655 = vmatpush1.xpose.msra.mxu0 0.0
        %656 = vmatprep.subr.mxu0 0.0
        %657 = vmatpush1.xpose.msra.mxu0 0.0
        %658 = vmatprep.subr.mxu0 0.0
        %659 = vmatpush1.xpose.msra.mxu0 0.0
        %660 = vmatprep.subr.mxu0 0.0
        %661 = vmatpush1.xpose.msra.mxu0 0.0
        %662 = vmatprep.subr.mxu0 0.0
        %663 = vmatpush1.xpose.msra.mxu0 0.0
        %664 = vmatprep.subr.mxu0 0.0
        %665 = vmatpush1.xpose.msra.mxu0 0.0
        %666 = vmatprep.subr.mxu0 0.0
        %667 = vmatpush1.xpose.msra.mxu0 0.0
        %668 = vmatprep.subr.mxu0 0.0
        %669 = vmatpush1.xpose.msra.mxu0 0.0
        %670 = vmatprep.subr.mxu0 0.0
        %671 = vmatpush1.xpose.msra.mxu0 0.0
        %672 = vmatprep.subr.mxu0 0.0
        %673 = vmatpush1.xpose.msra.mxu0 0.0
        %674 = vmatprep.subr.mxu0 0.0
        %675 = vmatpush1.xpose.msra.mxu0 0.0
        %676 = vmatprep.subr.mxu0 0.0
        %677 = vmatpush1.xpose.msra.mxu0 0.0
        %678 = vmatprep.subr.mxu0 0.0
        %679 = vmatpush1.xpose.msra.mxu0 0.0
        %680 = vmatprep.subr.mxu0 0.0
        %681 = vmatpush1.xpose.msra.mxu0 0.0
        %682 = vmatprep.subr.mxu0 0.0
        %683 = vmatpush1.xpose.msra.mxu0 0.0
        %684 = vmatprep.subr.mxu0 0.0
        %685 = vmatpush1.xpose.msra.mxu0 0.0
        %686 = vmatprep.subr.mxu0 0.0
        %687 = vmatpush1.xpose.msra.mxu0 0.0
        %688 = vmatprep.subr.mxu0 0.0
        %689 = vmatpush1.xpose.msra.mxu0 0.0
        %690 = vmatprep.subr.mxu0 0.0
        %691 = vmatpush1.xpose.msra.mxu0 0.0
        %692 = vmatprep.subr.mxu0 0.0
        %693 = vmatpush1.xpose.msra.mxu0 0.0
        %694 = vmatprep.mubr.f32.mxu0 %v253
        %695 = vmatmul.mubr.f32.gmra.mrb[0].mxu0 %v220
        %v696 = vpop.f32.mrb[0].mxu0
        %v697 = vadd.f32 %v627, %v696
        %v698 = vpop.f32.mrb[0].mxu0
        %699 = vdwg.mxu0
        %700 = vmatprep.subr.mxu0 %v254
        %701 = vmatpush1.xpose.msra.mxu0 %v221
        %702 = vmatprep.subr.mxu0 0.0
        %703 = vmatpush1.xpose.msra.mxu0 0.0
        %704 = vmatprep.subr.mxu0 0.0
        %705 = vmatpush1.xpose.msra.mxu0 0.0
        %706 = vmatprep.subr.mxu0 0.0
        %707 = vmatpush1.xpose.msra.mxu0 0.0
        %708 = vmatprep.subr.mxu0 0.0
        %709 = vmatpush1.xpose.msra.mxu0 0.0
        %710 = vmatprep.subr.mxu0 0.0
        %711 = vmatpush1.xpose.msra.mxu0 0.0
        %712 = vmatprep.subr.mxu0 0.0
        %713 = vmatpush1.xpose.msra.mxu0 0.0
        %714 = vmatprep.subr.mxu0 0.0
        %715 = vmatpush1.xpose.msra.mxu0 0.0
        %716 = vmatprep.subr.mxu0 0.0
        %717 = vmatpush1.xpose.msra.mxu0 0.0
        %718 = vmatprep.subr.mxu0 0.0
        %719 = vmatpush1.xpose.msra.mxu0 0.0
        %720 = vmatprep.subr.mxu0 0.0
        %721 = vmatpush1.xpose.msra.mxu0 0.0
        %722 = vmatprep.subr.mxu0 0.0
        %723 = vmatpush1.xpose.msra.mxu0 0.0
        %724 = vmatprep.subr.mxu0 0.0
        %725 = vmatpush1.xpose.msra.mxu0 0.0
        %726 = vmatprep.subr.mxu0 0.0
        %727 = vmatpush1.xpose.msra.mxu0 0.0
        %728 = vmatprep.subr.mxu0 0.0
        %729 = vmatpush1.xpose.msra.mxu0 0.0
        %730 = vmatprep.subr.mxu0 0.0
        %731 = vmatpush1.xpose.msra.mxu0 0.0
        %732 = vmatprep.subr.mxu0 0.0
        %733 = vmatpush1.xpose.msra.mxu0 0.0
        %734 = vmatprep.subr.mxu0 0.0
        %735 = vmatpush1.xpose.msra.mxu0 0.0
        %736 = vmatprep.subr.mxu0 0.0
        %737 = vmatpush1.xpose.msra.mxu0 0.0
        %738 = vmatprep.subr.mxu0 0.0
        %739 = vmatpush1.xpose.msra.mxu0 0.0
        %740 = vmatprep.subr.mxu0 0.0
        %741 = vmatpush1.xpose.msra.mxu0 0.0
        %742 = vmatprep.subr.mxu0 0.0
        %743 = vmatpush1.xpose.msra.mxu0 0.0
        %744 = vmatprep.subr.mxu0 0.0
        %745 = vmatpush1.xpose.msra.mxu0 0.0
        %746 = vmatprep.subr.mxu0 0.0
        %747 = vmatpush1.xpose.msra.mxu0 0.0
        %748 = vmatprep.subr.mxu0 0.0
        %749 = vmatpush1.xpose.msra.mxu0 0.0
        %750 = vmatprep.subr.mxu0 0.0
        %751 = vmatpush1.xpose.msra.mxu0 0.0
        %752 = vmatprep.subr.mxu0 0.0
        %753 = vmatpush1.xpose.msra.mxu0 0.0
        %754 = vmatprep.subr.mxu0 0.0
        %755 = vmatpush1.xpose.msra.mxu0 0.0
        %756 = vmatprep.subr.mxu0 0.0
        %757 = vmatpush1.xpose.msra.mxu0 0.0
        %758 = vmatprep.subr.mxu0 0.0
        %759 = vmatpush1.xpose.msra.mxu0 0.0
        %760 = vmatprep.subr.mxu0 0.0
        %761 = vmatpush1.xpose.msra.mxu0 0.0
        %762 = vmatprep.subr.mxu0 0.0
        %763 = vmatpush1.xpose.msra.mxu0 0.0
        %764 = vmatprep.mubr.f32.mxu0 %v254
        %765 = vmatmul.mubr.f32.gmra.mrb[0].mxu0 %v221
        %v766 = vpop.f32.mrb[0].mxu0
        %v767 = vadd.f32 %v697, %v766
        %v768 = vpop.f32.mrb[0].mxu0
        %769 = vdwg.mxu0
        %770 = vmatprep.subr.mxu0 %v255
        %771 = vmatpush1.xpose.msra.mxu0 %v222
        %772 = vmatprep.subr.mxu0 0.0
        %773 = vmatpush1.xpose.msra.mxu0 0.0
        %774 = vmatprep.subr.mxu0 0.0
        %775 = vmatpush1.xpose.msra.mxu0 0.0
        %776 = vmatprep.subr.mxu0 0.0
        %777 = vmatpush1.xpose.msra.mxu0 0.0
        %778 = vmatprep.subr.mxu0 0.0
        %779 = vmatpush1.xpose.msra.mxu0 0.0
        %780 = vmatprep.subr.mxu0 0.0
        %781 = vmatpush1.xpose.msra.mxu0 0.0
        %782 = vmatprep.subr.mxu0 0.0
        %783 = vmatpush1.xpose.msra.mxu0 0.0
        %784 = vmatprep.subr.mxu0 0.0
        %785 = vmatpush1.xpose.msra.mxu0 0.0
        %786 = vmatprep.subr.mxu0 0.0
        %787 = vmatpush1.xpose.msra.mxu0 0.0
        %788 = vmatprep.subr.mxu0 0.0
        %789 = vmatpush1.xpose.msra.mxu0 0.0
        %790 = vmatprep.subr.mxu0 0.0
        %791 = vmatpush1.xpose.msra.mxu0 0.0
        %792 = vmatprep.subr.mxu0 0.0
        %793 = vmatpush1.xpose.msra.mxu0 0.0
        %794 = vmatprep.subr.mxu0 0.0
        %795 = vmatpush1.xpose.msra.mxu0 0.0
        %796 = vmatprep.subr.mxu0 0.0
        %797 = vmatpush1.xpose.msra.mxu0 0.0
        %798 = vmatprep.subr.mxu0 0.0
        %799 = vmatpush1.xpose.msra.mxu0 0.0
        %800 = vmatprep.subr.mxu0 0.0
        %801 = vmatpush1.xpose.msra.mxu0 0.0
        %802 = vmatprep.subr.mxu0 0.0
        %803 = vmatpush1.xpose.msra.mxu0 0.0
        %804 = vmatprep.subr.mxu0 0.0
        %805 = vmatpush1.xpose.msra.mxu0 0.0
        %806 = vmatprep.subr.mxu0 0.0
        %807 = vmatpush1.xpose.msra.mxu0 0.0
        %808 = vmatprep.subr.mxu0 0.0
        %809 = vmatpush1.xpose.msra.mxu0 0.0
        %810 = vmatprep.subr.mxu0 0.0
        %811 = vmatpush1.xpose.msra.mxu0 0.0
        %812 = vmatprep.subr.mxu0 0.0
        %813 = vmatpush1.xpose.msra.mxu0 0.0
        %814 = vmatprep.subr.mxu0 0.0
        %815 = vmatpush1.xpose.msra.mxu0 0.0
        %816 = vmatprep.subr.mxu0 0.0
        %817 = vmatpush1.xpose.msra.mxu0 0.0
        %818 = vmatprep.subr.mxu0 0.0
        %819 = vmatpush1.xpose.msra.mxu0 0.0
        %820 = vmatprep.subr.mxu0 0.0
        %821 = vmatpush1.xpose.msra.mxu0 0.0
        %822 = vmatprep.subr.mxu0 0.0
        %823 = vmatpush1.xpose.msra.mxu0 0.0
        %824 = vmatprep.subr.mxu0 0.0
        %825 = vmatpush1.xpose.msra.mxu0 0.0
        %826 = vmatprep.subr.mxu0 0.0
        %827 = vmatpush1.xpose.msra.mxu0 0.0
        %828 = vmatprep.subr.mxu0 0.0
        %829 = vmatpush1.xpose.msra.mxu0 0.0
        %830 = vmatprep.subr.mxu0 0.0
        %831 = vmatpush1.xpose.msra.mxu0 0.0
        %832 = vmatprep.subr.mxu0 0.0
        %833 = vmatpush1.xpose.msra.mxu0 0.0
        %834 = vmatprep.mubr.f32.mxu0 %v255
        %835 = vmatmul.mubr.f32.gmra.mrb[0].mxu0 %v222
        %v836 = vpop.f32.mrb[0].mxu0
        %v837 = vadd.f32 %v767, %v836
        %v838 = vpop.f32.mrb[0].mxu0
        %839 = vdwg.mxu0
        %840 = vmatprep.subr.mxu0 %v256
        %841 = vmatpush1.xpose.msra.mxu0 %v223
        %842 = vmatprep.subr.mxu0 0.0
        %843 = vmatpush1.xpose.msra.mxu0 0.0
        %844 = vmatprep.subr.mxu0 0.0
        %845 = vmatpush1.xpose.msra.mxu0 0.0
        %846 = vmatprep.subr.mxu0 0.0
        %847 = vmatpush1.xpose.msra.mxu0 0.0
        %848 = vmatprep.subr.mxu0 0.0
        %849 = vmatpush1.xpose.msra.mxu0 0.0
        %850 = vmatprep.subr.mxu0 0.0
        %851 = vmatpush1.xpose.msra.mxu0 0.0
        %852 = vmatprep.subr.mxu0 0.0
        %853 = vmatpush1.xpose.msra.mxu0 0.0
        %854 = vmatprep.subr.mxu0 0.0
        %855 = vmatpush1.xpose.msra.mxu0 0.0
        %856 = vmatprep.subr.mxu0 0.0
        %857 = vmatpush1.xpose.msra.mxu0 0.0
        %858 = vmatprep.subr.mxu0 0.0
        %859 = vmatpush1.xpose.msra.mxu0 0.0
        %860 = vmatprep.subr.mxu0 0.0
        %861 = vmatpush1.xpose.msra.mxu0 0.0
        %862 = vmatprep.subr.mxu0 0.0
        %863 = vmatpush1.xpose.msra.mxu0 0.0
        %864 = vmatprep.subr.mxu0 0.0
        %865 = vmatpush1.xpose.msra.mxu0 0.0
        %866 = vmatprep.subr.mxu0 0.0
        %867 = vmatpush1.xpose.msra.mxu0 0.0
        %868 = vmatprep.subr.mxu0 0.0
        %869 = vmatpush1.xpose.msra.mxu0 0.0
        %870 = vmatprep.subr.mxu0 0.0
        %871 = vmatpush1.xpose.msra.mxu0 0.0
        %872 = vmatprep.subr.mxu0 0.0
        %873 = vmatpush1.xpose.msra.mxu0 0.0
        %874 = vmatprep.subr.mxu0 0.0
        %875 = vmatpush1.xpose.msra.mxu0 0.0
        %876 = vmatprep.subr.mxu0 0.0
        %877 = vmatpush1.xpose.msra.mxu0 0.0
        %878 = vmatprep.subr.mxu0 0.0
        %879 = vmatpush1.xpose.msra.mxu0 0.0
        %880 = vmatprep.subr.mxu0 0.0
        %881 = vmatpush1.xpose.msra.mxu0 0.0
        %882 = vmatprep.subr.mxu0 0.0
        %883 = vmatpush1.xpose.msra.mxu0 0.0
        %884 = vmatprep.subr.mxu0 0.0
        %885 = vmatpush1.xpose.msra.mxu0 0.0
        %886 = vmatprep.subr.mxu0 0.0
        %887 = vmatpush1.xpose.msra.mxu0 0.0
        %888 = vmatprep.subr.mxu0 0.0
        %889 = vmatpush1.xpose.msra.mxu0 0.0
        %890 = vmatprep.subr.mxu0 0.0
        %891 = vmatpush1.xpose.msra.mxu0 0.0
        %892 = vmatprep.subr.mxu0 0.0
        %893 = vmatpush1.xpose.msra.mxu0 0.0
        %894 = vmatprep.subr.mxu0 0.0
        %895 = vmatpush1.xpose.msra.mxu0 0.0
        %896 = vmatprep.subr.mxu0 0.0
        %897 = vmatpush1.xpose.msra.mxu0 0.0
        %898 = vmatprep.subr.mxu0 0.0
        %899 = vmatpush1.xpose.msra.mxu0 0.0
        %900 = vmatprep.subr.mxu0 0.0
        %901 = vmatpush1.xpose.msra.mxu0 0.0
        %902 = vmatprep.subr.mxu0 0.0
        %903 = vmatpush1.xpose.msra.mxu0 0.0
        %904 = vmatprep.mubr.f32.mxu0 %v256
        %905 = vmatmul.mubr.f32.gmra.mrb[0].mxu0 %v223
        %v906 = vpop.f32.mrb[0].mxu0
        %v907 = vadd.f32 %v837, %v906
        %v908 = vpop.f32.mrb[0].mxu0
        %909 = vdwg.mxu0
        %910 = vmatprep.subr.mxu0 %v257
        %911 = vmatpush1.xpose.msra.mxu0 %v224
        %912 = vmatprep.subr.mxu0 0.0
        %913 = vmatpush1.xpose.msra.mxu0 0.0
        %914 = vmatprep.subr.mxu0 0.0
        %915 = vmatpush1.xpose.msra.mxu0 0.0
        %916 = vmatprep.subr.mxu0 0.0
        %917 = vmatpush1.xpose.msra.mxu0 0.0
        %918 = vmatprep.subr.mxu0 0.0
        %919 = vmatpush1.xpose.msra.mxu0 0.0
        %920 = vmatprep.subr.mxu0 0.0
        %921 = vmatpush1.xpose.msra.mxu0 0.0
        %922 = vmatprep.subr.mxu0 0.0
        %923 = vmatpush1.xpose.msra.mxu0 0.0
        %924 = vmatprep.subr.mxu0 0.0
        %925 = vmatpush1.xpose.msra.mxu0 0.0
        %926 = vmatprep.subr.mxu0 0.0
        %927 = vmatpush1.xpose.msra.mxu0 0.0
        %928 = vmatprep.subr.mxu0 0.0
        %929 = vmatpush1.xpose.msra.mxu0 0.0
        %930 = vmatprep.subr.mxu0 0.0
        %931 = vmatpush1.xpose.msra.mxu0 0.0
        %932 = vmatprep.subr.mxu0 0.0
        %933 = vmatpush1.xpose.msra.mxu0 0.0
        %934 = vmatprep.subr.mxu0 0.0
        %935 = vmatpush1.xpose.msra.mxu0 0.0
        %936 = vmatprep.subr.mxu0 0.0
        %937 = vmatpush1.xpose.msra.mxu0 0.0
        %938 = vmatprep.subr.mxu0 0.0
        %939 = vmatpush1.xpose.msra.mxu0 0.0
        %940 = vmatprep.subr.mxu0 0.0
        %941 = vmatpush1.xpose.msra.mxu0 0.0
        %942 = vmatprep.subr.mxu0 0.0
        %943 = vmatpush1.xpose.msra.mxu0 0.0
        %944 = vmatprep.subr.mxu0 0.0
        %945 = vmatpush1.xpose.msra.mxu0 0.0
        %946 = vmatprep.subr.mxu0 0.0
        %947 = vmatpush1.xpose.msra.mxu0 0.0
        %948 = vmatprep.subr.mxu0 0.0
        %949 = vmatpush1.xpose.msra.mxu0 0.0
        %950 = vmatprep.subr.mxu0 0.0
        %951 = vmatpush1.xpose.msra.mxu0 0.0
        %952 = vmatprep.subr.mxu0 0.0
        %953 = vmatpush1.xpose.msra.mxu0 0.0
        %954 = vmatprep.subr.mxu0 0.0
        %955 = vmatpush1.xpose.msra.mxu0 0.0
        %956 = vmatprep.subr.mxu0 0.0
        %957 = vmatpush1.xpose.msra.mxu0 0.0
        %958 = vmatprep.subr.mxu0 0.0
        %959 = vmatpush1.xpose.msra.mxu0 0.0
        %960 = vmatprep.subr.mxu0 0.0
        %961 = vmatpush1.xpose.msra.mxu0 0.0
        %962 = vmatprep.subr.mxu0 0.0
        %963 = vmatpush1.xpose.msra.mxu0 0.0
        %964 = vmatprep.subr.mxu0 0.0
        %965 = vmatpush1.xpose.msra.mxu0 0.0
        %966 = vmatprep.subr.mxu0 0.0
        %967 = vmatpush1.xpose.msra.mxu0 0.0
        %968 = vmatprep.subr.mxu0 0.0
        %969 = vmatpush1.xpose.msra.mxu0 0.0
        %970 = vmatprep.subr.mxu0 0.0
        %971 = vmatpush1.xpose.msra.mxu0 0.0
        %972 = vmatprep.subr.mxu0 0.0
        %973 = vmatpush1.xpose.msra.mxu0 0.0
        %974 = vmatprep.mubr.f32.mxu0 %v257
        %975 = vmatmul.mubr.f32.gmra.mrb[0].mxu0 %v224
        %v976 = vpop.f32.mrb[0].mxu0
        %v977 = vadd.f32 %v907, %v976
        %v978 = vpop.f32.mrb[0].mxu0
        %979 = vdwg.mxu0
        %980 = vmatprep.subr.mxu0 %v258
        %981 = vmatpush1.xpose.msra.mxu0 %v225
        %982 = vmatprep.subr.mxu0 0.0
        %983 = vmatpush1.xpose.msra.mxu0 0.0
        %984 = vmatprep.subr.mxu0 0.0
        %985 = vmatpush1.xpose.msra.mxu0 0.0
        %986 = vmatprep.subr.mxu0 0.0
        %987 = vmatpush1.xpose.msra.mxu0 0.0
        %988 = vmatprep.subr.mxu0 0.0
        %989 = vmatpush1.xpose.msra.mxu0 0.0
        %990 = vmatprep.subr.mxu0 0.0
        %991 = vmatpush1.xpose.msra.mxu0 0.0
        %992 = vmatprep.subr.mxu0 0.0
        %993 = vmatpush1.xpose.msra.mxu0 0.0
        %994 = vmatprep.subr.mxu0 0.0
        %995 = vmatpush1.xpose.msra.mxu0 0.0
        %996 = vmatprep.subr.mxu0 0.0
        %997 = vmatpush1.xpose.msra.mxu0 0.0
        %998 = vmatprep.subr.mxu0 0.0
        %999 = vmatpush1.xpose.msra.mxu0 0.0
        %1000 = vmatprep.subr.mxu0 0.0
        %1001 = vmatpush1.xpose.msra.mxu0 0.0
        %1002 = vmatprep.subr.mxu0 0.0
        %1003 = vmatpush1.xpose.msra.mxu0 0.0
        %1004 = vmatprep.subr.mxu0 0.0
        %1005 = vmatpush1.xpose.msra.mxu0 0.0
        %1006 = vmatprep.subr.mxu0 0.0
        %1007 = vmatpush1.xpose.msra.mxu0 0.0
        %1008 = vmatprep.subr.mxu0 0.0
        %1009 = vmatpush1.xpose.msra.mxu0 0.0
        %1010 = vmatprep.subr.mxu0 0.0
        %1011 = vmatpush1.xpose.msra.mxu0 0.0
        %1012 = vmatprep.subr.mxu0 0.0
        %1013 = vmatpush1.xpose.msra.mxu0 0.0
        %1014 = vmatprep.subr.mxu0 0.0
        %1015 = vmatpush1.xpose.msra.mxu0 0.0
        %1016 = vmatprep.subr.mxu0 0.0
        %1017 = vmatpush1.xpose.msra.mxu0 0.0
        %1018 = vmatprep.subr.mxu0 0.0
        %1019 = vmatpush1.xpose.msra.mxu0 0.0
        %1020 = vmatprep.subr.mxu0 0.0
        %1021 = vmatpush1.xpose.msra.mxu0 0.0
        %1022 = vmatprep.subr.mxu0 0.0
        %1023 = vmatpush1.xpose.msra.mxu0 0.0
        %1024 = vmatprep.subr.mxu0 0.0
        %1025 = vmatpush1.xpose.msra.mxu0 0.0
        %1026 = vmatprep.subr.mxu0 0.0
        %1027 = vmatpush1.xpose.msra.mxu0 0.0
        %1028 = vmatprep.subr.mxu0 0.0
        %1029 = vmatpush1.xpose.msra.mxu0 0.0
        %1030 = vmatprep.subr.mxu0 0.0
        %1031 = vmatpush1.xpose.msra.mxu0 0.0
        %1032 = vmatprep.subr.mxu0 0.0
        %1033 = vmatpush1.xpose.msra.mxu0 0.0
        %1034 = vmatprep.subr.mxu0 0.0
        %1035 = vmatpush1.xpose.msra.mxu0 0.0
        %1036 = vmatprep.subr.mxu0 0.0
        %1037 = vmatpush1.xpose.msra.mxu0 0.0
        %1038 = vmatprep.subr.mxu0 0.0
        %1039 = vmatpush1.xpose.msra.mxu0 0.0
        %1040 = vmatprep.subr.mxu0 0.0
        %1041 = vmatpush1.xpose.msra.mxu0 0.0
        %1042 = vmatprep.subr.mxu0 0.0
        %1043 = vmatpush1.xpose.msra.mxu0 0.0
        %1044 = vmatprep.mubr.f32.mxu0 %v258
        %1045 = vmatmul.mubr.f32.gmra.mrb[0].mxu0 %v225
        %v1046 = vpop.f32.mrb[0].mxu0
        %v1047 = vadd.f32 %v977, %v1046
        %v1048 = vpop.f32.mrb[0].mxu0
        %1049 = vdwg.mxu0
        %1050 = vmatprep.subr.mxu0 %v259
        %1051 = vmatpush1.xpose.msra.mxu0 %v226
        %1052 = vmatprep.subr.mxu0 0.0
        %1053 = vmatpush1.xpose.msra.mxu0 0.0
        %1054 = vmatprep.subr.mxu0 0.0
        %1055 = vmatpush1.xpose.msra.mxu0 0.0
        %1056 = vmatprep.subr.mxu0 0.0
        %1057 = vmatpush1.xpose.msra.mxu0 0.0
        %1058 = vmatprep.subr.mxu0 0.0
        %1059 = vmatpush1.xpose.msra.mxu0 0.0
        %1060 = vmatprep.subr.mxu0 0.0
        %1061 = vmatpush1.xpose.msra.mxu0 0.0
        %1062 = vmatprep.subr.mxu0 0.0
        %1063 = vmatpush1.xpose.msra.mxu0 0.0
        %1064 = vmatprep.subr.mxu0 0.0
        %1065 = vmatpush1.xpose.msra.mxu0 0.0
        %1066 = vmatprep.subr.mxu0 0.0
        %1067 = vmatpush1.xpose.msra.mxu0 0.0
        %1068 = vmatprep.subr.mxu0 0.0
        %1069 = vmatpush1.xpose.msra.mxu0 0.0
        %1070 = vmatprep.subr.mxu0 0.0
        %1071 = vmatpush1.xpose.msra.mxu0 0.0
        %1072 = vmatprep.subr.mxu0 0.0
        %1073 = vmatpush1.xpose.msra.mxu0 0.0
        %1074 = vmatprep.subr.mxu0 0.0
        %1075 = vmatpush1.xpose.msra.mxu0 0.0
        %1076 = vmatprep.subr.mxu0 0.0
        %1077 = vmatpush1.xpose.msra.mxu0 0.0
        %1078 = vmatprep.subr.mxu0 0.0
        %1079 = vmatpush1.xpose.msra.mxu0 0.0
        %1080 = vmatprep.subr.mxu0 0.0
        %1081 = vmatpush1.xpose.msra.mxu0 0.0
        %1082 = vmatprep.subr.mxu0 0.0
        %1083 = vmatpush1.xpose.msra.mxu0 0.0
        %1084 = vmatprep.subr.mxu0 0.0
        %1085 = vmatpush1.xpose.msra.mxu0 0.0
        %1086 = vmatprep.subr.mxu0 0.0
        %1087 = vmatpush1.xpose.msra.mxu0 0.0
        %1088 = vmatprep.subr.mxu0 0.0
        %1089 = vmatpush1.xpose.msra.mxu0 0.0
        %1090 = vmatprep.subr.mxu0 0.0
        %1091 = vmatpush1.xpose.msra.mxu0 0.0
        %1092 = vmatprep.subr.mxu0 0.0
        %1093 = vmatpush1.xpose.msra.mxu0 0.0
        %1094 = vmatprep.subr.mxu0 0.0
        %1095 = vmatpush1.xpose.msra.mxu0 0.0
        %1096 = vmatprep.subr.mxu0 0.0
        %1097 = vmatpush1.xpose.msra.mxu0 0.0
        %1098 = vmatprep.subr.mxu0 0.0
        %1099 = vmatpush1.xpose.msra.mxu0 0.0
        %1100 = vmatprep.subr.mxu0 0.0
        %1101 = vmatpush1.xpose.msra.mxu0 0.0
        %1102 = vmatprep.subr.mxu0 0.0
        %1103 = vmatpush1.xpose.msra.mxu0 0.0
        %1104 = vmatprep.subr.mxu0 0.0
        %1105 = vmatpush1.xpose.msra.mxu0 0.0
        %1106 = vmatprep.subr.mxu0 0.0
        %1107 = vmatpush1.xpose.msra.mxu0 0.0
        %1108 = vmatprep.subr.mxu0 0.0
        %1109 = vmatpush1.xpose.msra.mxu0 0.0
        %1110 = vmatprep.subr.mxu0 0.0
        %1111 = vmatpush1.xpose.msra.mxu0 0.0
        %1112 = vmatprep.subr.mxu0 0.0
        %1113 = vmatpush1.xpose.msra.mxu0 0.0
        %1114 = vmatprep.mubr.f32.mxu0 %v259
        %1115 = vmatmul.mubr.f32.gmra.mrb[0].mxu0 %v226
        %v1116 = vpop.f32.mrb[0].mxu0
        %v1117 = vadd.f32 %v1047, %v1116
        %v1118 = vpop.f32.mrb[0].mxu0
        %1119 = vdwg.mxu0
        %1120 = vmatprep.subr.mxu0 %v260
        %1121 = vmatpush1.xpose.msra.mxu0 %v227
        %1122 = vmatprep.subr.mxu0 0.0
        %1123 = vmatpush1.xpose.msra.mxu0 0.0
        %1124 = vmatprep.subr.mxu0 0.0
        %1125 = vmatpush1.xpose.msra.mxu0 0.0
        %1126 = vmatprep.subr.mxu0 0.0
        %1127 = vmatpush1.xpose.msra.mxu0 0.0
        %1128 = vmatprep.subr.mxu0 0.0
        %1129 = vmatpush1.xpose.msra.mxu0 0.0
        %1130 = vmatprep.subr.mxu0 0.0
        %1131 = vmatpush1.xpose.msra.mxu0 0.0
        %1132 = vmatprep.subr.mxu0 0.0
        %1133 = vmatpush1.xpose.msra.mxu0 0.0
        %1134 = vmatprep.subr.mxu0 0.0
        %1135 = vmatpush1.xpose.msra.mxu0 0.0
        %1136 = vmatprep.subr.mxu0 0.0
        %1137 = vmatpush1.xpose.msra.mxu0 0.0
        %1138 = vmatprep.subr.mxu0 0.0
        %1139 = vmatpush1.xpose.msra.mxu0 0.0
        %1140 = vmatprep.subr.mxu0 0.0
        %1141 = vmatpush1.xpose.msra.mxu0 0.0
        %1142 = vmatprep.subr.mxu0 0.0
        %1143 = vmatpush1.xpose.msra.mxu0 0.0
        %1144 = vmatprep.subr.mxu0 0.0
        %1145 = vmatpush1.xpose.msra.mxu0 0.0
        %1146 = vmatprep.subr.mxu0 0.0
        %1147 = vmatpush1.xpose.msra.mxu0 0.0
        %1148 = vmatprep.subr.mxu0 0.0
        %1149 = vmatpush1.xpose.msra.mxu0 0.0
        %1150 = vmatprep.subr.mxu0 0.0
        %1151 = vmatpush1.xpose.msra.mxu0 0.0
        %1152 = vmatprep.subr.mxu0 0.0
        %1153 = vmatpush1.xpose.msra.mxu0 0.0
        %1154 = vmatprep.subr.mxu0 0.0
        %1155 = vmatpush1.xpose.msra.mxu0 0.0
        %1156 = vmatprep.subr.mxu0 0.0
        %1157 = vmatpush1.xpose.msra.mxu0 0.0
        %1158 = vmatprep.subr.mxu0 0.0
        %1159 = vmatpush1.xpose.msra.mxu0 0.0
        %1160 = vmatprep.subr.mxu0 0.0
        %1161 = vmatpush1.xpose.msra.mxu0 0.0
        %1162 = vmatprep.subr.mxu0 0.0
        %1163 = vmatpush1.xpose.msra.mxu0 0.0
        %1164 = vmatprep.subr.mxu0 0.0
        %1165 = vmatpush1.xpose.msra.mxu0 0.0
        %1166 = vmatprep.subr.mxu0 0.0
        %1167 = vmatpush1.xpose.msra.mxu0 0.0
        %1168 = vmatprep.subr.mxu0 0.0
        %1169 = vmatpush1.xpose.msra.mxu0 0.0
        %1170 = vmatprep.subr.mxu0 0.0
        %1171 = vmatpush1.xpose.msra.mxu0 0.0
        %1172 = vmatprep.subr.mxu0 0.0
        %1173 = vmatpush1.xpose.msra.mxu0 0.0
        %1174 = vmatprep.subr.mxu0 0.0
        %1175 = vmatpush1.xpose.msra.mxu0 0.0
        %1176 = vmatprep.subr.mxu0 0.0
        %1177 = vmatpush1.xpose.msra.mxu0 0.0
        %1178 = vmatprep.subr.mxu0 0.0
        %1179 = vmatpush1.xpose.msra.mxu0 0.0
        %1180 = vmatprep.subr.mxu0 0.0
        %1181 = vmatpush1.xpose.msra.mxu0 0.0
        %1182 = vmatprep.subr.mxu0 0.0
        %1183 = vmatpush1.xpose.msra.mxu0 0.0
        %1184 = vmatprep.mubr.f32.mxu0 %v260
        %1185 = vmatmul.mubr.f32.gmra.mrb[0].mxu0 %v227
        %v1186 = vpop.f32.mrb[0].mxu0
        %v1187 = vadd.f32 %v1117, %v1186
        %v1188 = vpop.f32.mrb[0].mxu0
        %1189 = vdwg.mxu0
        %1190 = vmatprep.subr.mxu0 %v261
        %1191 = vmatpush1.xpose.msra.mxu0 %v228
        %1192 = vmatprep.subr.mxu0 0.0
        %1193 = vmatpush1.xpose.msra.mxu0 0.0
        %1194 = vmatprep.subr.mxu0 0.0
        %1195 = vmatpush1.xpose.msra.mxu0 0.0
        %1196 = vmatprep.subr.mxu0 0.0
        %1197 = vmatpush1.xpose.msra.mxu0 0.0
        %1198 = vmatprep.subr.mxu0 0.0
        %1199 = vmatpush1.xpose.msra.mxu0 0.0
        %1200 = vmatprep.subr.mxu0 0.0
        %1201 = vmatpush1.xpose.msra.mxu0 0.0
        %1202 = vmatprep.subr.mxu0 0.0
        %1203 = vmatpush1.xpose.msra.mxu0 0.0
        %1204 = vmatprep.subr.mxu0 0.0
        %1205 = vmatpush1.xpose.msra.mxu0 0.0
        %1206 = vmatprep.subr.mxu0 0.0
        %1207 = vmatpush1.xpose.msra.mxu0 0.0
        %1208 = vmatprep.subr.mxu0 0.0
        %1209 = vmatpush1.xpose.msra.mxu0 0.0
        %1210 = vmatprep.subr.mxu0 0.0
        %1211 = vmatpush1.xpose.msra.mxu0 0.0
        %1212 = vmatprep.subr.mxu0 0.0
        %1213 = vmatpush1.xpose.msra.mxu0 0.0
        %1214 = vmatprep.subr.mxu0 0.0
        %1215 = vmatpush1.xpose.msra.mxu0 0.0
        %1216 = vmatprep.subr.mxu0 0.0
        %1217 = vmatpush1.xpose.msra.mxu0 0.0
        %1218 = vmatprep.subr.mxu0 0.0
        %1219 = vmatpush1.xpose.msra.mxu0 0.0
        %1220 = vmatprep.subr.mxu0 0.0
        %1221 = vmatpush1.xpose.msra.mxu0 0.0
        %1222 = vmatprep.subr.mxu0 0.0
        %1223 = vmatpush1.xpose.msra.mxu0 0.0
        %1224 = vmatprep.subr.mxu0 0.0
        %1225 = vmatpush1.xpose.msra.mxu0 0.0
        %1226 = vmatprep.subr.mxu0 0.0
        %1227 = vmatpush1.xpose.msra.mxu0 0.0
        %1228 = vmatprep.subr.mxu0 0.0
        %1229 = vmatpush1.xpose.msra.mxu0 0.0
        %1230 = vmatprep.subr.mxu0 0.0
        %1231 = vmatpush1.xpose.msra.mxu0 0.0
        %1232 = vmatprep.subr.mxu0 0.0
        %1233 = vmatpush1.xpose.msra.mxu0 0.0
        %1234 = vmatprep.subr.mxu0 0.0
        %1235 = vmatpush1.xpose.msra.mxu0 0.0
        %1236 = vmatprep.subr.mxu0 0.0
        %1237 = vmatpush1.xpose.msra.mxu0 0.0
        %1238 = vmatprep.subr.mxu0 0.0
        %1239 = vmatpush1.xpose.msra.mxu0 0.0
        %1240 = vmatprep.subr.mxu0 0.0
        %1241 = vmatpush1.xpose.msra.mxu0 0.0
        %1242 = vmatprep.subr.mxu0 0.0
        %1243 = vmatpush1.xpose.msra.mxu0 0.0
        %1244 = vmatprep.subr.mxu0 0.0
        %1245 = vmatpush1.xpose.msra.mxu0 0.0
        %1246 = vmatprep.subr.mxu0 0.0
        %1247 = vmatpush1.xpose.msra.mxu0 0.0
        %1248 = vmatprep.subr.mxu0 0.0
        %1249 = vmatpush1.xpose.msra.mxu0 0.0
        %1250 = vmatprep.subr.mxu0 0.0
        %1251 = vmatpush1.xpose.msra.mxu0 0.0
        %1252 = vmatprep.subr.mxu0 0.0
        %1253 = vmatpush1.xpose.msra.mxu0 0.0
        %1254 = vmatprep.mubr.f32.mxu0 %v261
        %1255 = vmatmul.mubr.f32.gmra.mrb[0].mxu0 %v228
        %v1256 = vpop.f32.mrb[0].mxu0
        %v1257 = vadd.f32 %v1187, %v1256
        %v1258 = vpop.f32.mrb[0].mxu0
        %1259 = vdwg.mxu0
        %1260 = vmatprep.subr.mxu0 %v262
        %1261 = vmatpush1.xpose.msra.mxu0 %v229
        %1262 = vmatprep.subr.mxu0 0.0
        %1263 = vmatpush1.xpose.msra.mxu0 0.0
        %1264 = vmatprep.subr.mxu0 0.0
        %1265 = vmatpush1.xpose.msra.mxu0 0.0
        %1266 = vmatprep.subr.mxu0 0.0
        %1267 = vmatpush1.xpose.msra.mxu0 0.0
        %1268 = vmatprep.subr.mxu0 0.0
        %1269 = vmatpush1.xpose.msra.mxu0 0.0
        %1270 = vmatprep.subr.mxu0 0.0
        %1271 = vmatpush1.xpose.msra.mxu0 0.0
        %1272 = vmatprep.subr.mxu0 0.0
        %1273 = vmatpush1.xpose.msra.mxu0 0.0
        %1274 = vmatprep.subr.mxu0 0.0
        %1275 = vmatpush1.xpose.msra.mxu0 0.0
        %1276 = vmatprep.subr.mxu0 0.0
        %1277 = vmatpush1.xpose.msra.mxu0 0.0
        %1278 = vmatprep.subr.mxu0 0.0
        %1279 = vmatpush1.xpose.msra.mxu0 0.0
        %1280 = vmatprep.subr.mxu0 0.0
        %1281 = vmatpush1.xpose.msra.mxu0 0.0
        %1282 = vmatprep.subr.mxu0 0.0
        %1283 = vmatpush1.xpose.msra.mxu0 0.0
        %1284 = vmatprep.subr.mxu0 0.0
        %1285 = vmatpush1.xpose.msra.mxu0 0.0
        %1286 = vmatprep.subr.mxu0 0.0
        %1287 = vmatpush1.xpose.msra.mxu0 0.0
        %1288 = vmatprep.subr.mxu0 0.0
        %1289 = vmatpush1.xpose.msra.mxu0 0.0
        %1290 = vmatprep.subr.mxu0 0.0
        %1291 = vmatpush1.xpose.msra.mxu0 0.0
        %1292 = vmatprep.subr.mxu0 0.0
        %1293 = vmatpush1.xpose.msra.mxu0 0.0
        %1294 = vmatprep.subr.mxu0 0.0
        %1295 = vmatpush1.xpose.msra.mxu0 0.0
        %1296 = vmatprep.subr.mxu0 0.0
        %1297 = vmatpush1.xpose.msra.mxu0 0.0
        %1298 = vmatprep.subr.mxu0 0.0
        %1299 = vmatpush1.xpose.msra.mxu0 0.0
        %1300 = vmatprep.subr.mxu0 0.0
        %1301 = vmatpush1.xpose.msra.mxu0 0.0
        %1302 = vmatprep.subr.mxu0 0.0
        %1303 = vmatpush1.xpose.msra.mxu0 0.0
        %1304 = vmatprep.subr.mxu0 0.0
        %1305 = vmatpush1.xpose.msra.mxu0 0.0
        %1306 = vmatprep.subr.mxu0 0.0
        %1307 = vmatpush1.xpose.msra.mxu0 0.0
        %1308 = vmatprep.subr.mxu0 0.0
        %1309 = vmatpush1.xpose.msra.mxu0 0.0
        %1310 = vmatprep.subr.mxu0 0.0
        %1311 = vmatpush1.xpose.msra.mxu0 0.0
        %1312 = vmatprep.subr.mxu0 0.0
        %1313 = vmatpush1.xpose.msra.mxu0 0.0
        %1314 = vmatprep.subr.mxu0 0.0
        %1315 = vmatpush1.xpose.msra.mxu0 0.0
        %1316 = vmatprep.subr.mxu0 0.0
        %1317 = vmatpush1.xpose.msra.mxu0 0.0
        %1318 = vmatprep.subr.mxu0 0.0
        %1319 = vmatpush1.xpose.msra.mxu0 0.0
        %1320 = vmatprep.subr.mxu0 0.0
        %1321 = vmatpush1.xpose.msra.mxu0 0.0
        %1322 = vmatprep.subr.mxu0 0.0
        %1323 = vmatpush1.xpose.msra.mxu0 0.0
        %1324 = vmatprep.mubr.f32.mxu0 %v262
        %1325 = vmatmul.mubr.f32.gmra.mrb[0].mxu0 %v229
        %v1326 = vpop.f32.mrb[0].mxu0
        %v1327 = vadd.f32 %v1257, %v1326
        %v1328 = vpop.f32.mrb[0].mxu0
        %1329 = vdwg.mxu0
        %1330 = vmatprep.subr.mxu0 %v263
        %1331 = vmatpush1.xpose.msra.mxu0 %v230
        %1332 = vmatprep.subr.mxu0 0.0
        %1333 = vmatpush1.xpose.msra.mxu0 0.0
        %1334 = vmatprep.subr.mxu0 0.0
        %1335 = vmatpush1.xpose.msra.mxu0 0.0
        %1336 = vmatprep.subr.mxu0 0.0
        %1337 = vmatpush1.xpose.msra.mxu0 0.0
        %1338 = vmatprep.subr.mxu0 0.0
        %1339 = vmatpush1.xpose.msra.mxu0 0.0
        %1340 = vmatprep.subr.mxu0 0.0
        %1341 = vmatpush1.xpose.msra.mxu0 0.0
        %1342 = vmatprep.subr.mxu0 0.0
        %1343 = vmatpush1.xpose.msra.mxu0 0.0
        %1344 = vmatprep.subr.mxu0 0.0
        %1345 = vmatpush1.xpose.msra.mxu0 0.0
        %1346 = vmatprep.subr.mxu0 0.0
        %1347 = vmatpush1.xpose.msra.mxu0 0.0
        %1348 = vmatprep.subr.mxu0 0.0
        %1349 = vmatpush1.xpose.msra.mxu0 0.0
        %1350 = vmatprep.subr.mxu0 0.0
        %1351 = vmatpush1.xpose.msra.mxu0 0.0
        %1352 = vmatprep.subr.mxu0 0.0
        %1353 = vmatpush1.xpose.msra.mxu0 0.0
        %1354 = vmatprep.subr.mxu0 0.0
        %1355 = vmatpush1.xpose.msra.mxu0 0.0
        %1356 = vmatprep.subr.mxu0 0.0
        %1357 = vmatpush1.xpose.msra.mxu0 0.0
        %1358 = vmatprep.subr.mxu0 0.0
        %1359 = vmatpush1.xpose.msra.mxu0 0.0
        %1360 = vmatprep.subr.mxu0 0.0
        %1361 = vmatpush1.xpose.msra.mxu0 0.0
        %1362 = vmatprep.subr.mxu0 0.0
        %1363 = vmatpush1.xpose.msra.mxu0 0.0
        %1364 = vmatprep.subr.mxu0 0.0
        %1365 = vmatpush1.xpose.msra.mxu0 0.0
        %1366 = vmatprep.subr.mxu0 0.0
        %1367 = vmatpush1.xpose.msra.mxu0 0.0
        %1368 = vmatprep.subr.mxu0 0.0
        %1369 = vmatpush1.xpose.msra.mxu0 0.0
        %1370 = vmatprep.subr.mxu0 0.0
        %1371 = vmatpush1.xpose.msra.mxu0 0.0
        %1372 = vmatprep.subr.mxu0 0.0
        %1373 = vmatpush1.xpose.msra.mxu0 0.0
        %1374 = vmatprep.subr.mxu0 0.0
        %1375 = vmatpush1.xpose.msra.mxu0 0.0
        %1376 = vmatprep.subr.mxu0 0.0
        %1377 = vmatpush1.xpose.msra.mxu0 0.0
        %1378 = vmatprep.subr.mxu0 0.0
        %1379 = vmatpush1.xpose.msra.mxu0 0.0
        %1380 = vmatprep.subr.mxu0 0.0
        %1381 = vmatpush1.xpose.msra.mxu0 0.0
        %1382 = vmatprep.subr.mxu0 0.0
        %1383 = vmatpush1.xpose.msra.mxu0 0.0
        %1384 = vmatprep.subr.mxu0 0.0
        %1385 = vmatpush1.xpose.msra.mxu0 0.0
        %1386 = vmatprep.subr.mxu0 0.0
        %1387 = vmatpush1.xpose.msra.mxu0 0.0
        %1388 = vmatprep.subr.mxu0 0.0
        %1389 = vmatpush1.xpose.msra.mxu0 0.0
        %1390 = vmatprep.subr.mxu0 0.0
        %1391 = vmatpush1.xpose.msra.mxu0 0.0
        %1392 = vmatprep.subr.mxu0 0.0
        %1393 = vmatpush1.xpose.msra.mxu0 0.0
        %1394 = vmatprep.mubr.f32.mxu0 %v263
        %1395 = vmatmul.mubr.f32.gmra.mrb[0].mxu0 %v230
        %v1396 = vpop.f32.mrb[0].mxu0
        %v1397 = vadd.f32 %v1327, %v1396
        %v1398 = vpop.f32.mrb[0].mxu0
        %1399 = vdwg.mxu0
        %v1400 = vadd.f32 %v231, %v1397
        %vm1401 = vcmask 27648
        %1402 = vst.msk [vmem:[%s190] sm:$0xf] %vm1401, %v1400
        %v1403 = vld [vmem:[%s205] sm:$0xf]
        %vm1404 = vcmask 1043456
        %v1405 = vsel %vm1404, %v215, 0.0
        %v1406 = vsel %vm1404, %v248, 0.0
        %v1407 = vadd.f32 %v1405, %v1406
        %v1408 = vsel %vm1404, %v216, 0.0
        %v1409 = vadd.f32 %v1407, %v1408
        %v1410 = vsel %vm1404, %v249, 0.0
        %v1411 = vadd.f32 %v1409, %v1410
        %v1412 = vsel %vm1404, %v217, 0.0
        %v1413 = vadd.f32 %v1411, %v1412
        %v1414 = vsel %vm1404, %v250, 0.0
        %v1415 = vadd.f32 %v1413, %v1414
        %v1416 = vsel %vm1404, %v218, 0.0
        %v1417 = vadd.f32 %v1415, %v1416
        %v1418 = vsel %vm1404, %v251, 0.0
        %v1419 = vadd.f32 %v1417, %v1418
        %v1420 = vsel %vm1404, %v219, 0.0
        %v1421 = vadd.f32 %v1419, %v1420
        %v1422 = vsel %vm1404, %v252, 0.0
        %v1423 = vadd.f32 %v1421, %v1422
        %v1424 = vsel %vm1404, %v220, 0.0
        %v1425 = vadd.f32 %v1423, %v1424
        %v1426 = vsel %vm1404, %v253, 0.0
        %v1427 = vadd.f32 %v1425, %v1426
        %v1428 = vsel %vm1404, %v221, 0.0
        %v1429 = vadd.f32 %v1427, %v1428
        %v1430 = vsel %vm1404, %v254, 0.0
        %v1431 = vadd.f32 %v1429, %v1430
        %v1432 = vsel %vm1404, %v222, 0.0
        %v1433 = vadd.f32 %v1431, %v1432
        %v1434 = vsel %vm1404, %v255, 0.0
        %v1435 = vadd.f32 %v1433, %v1434
        %v1436 = vsel %vm1404, %v223, 0.0
        %v1437 = vadd.f32 %v1435, %v1436
        %v1438 = vsel %vm1404, %v256, 0.0
        %v1439 = vadd.f32 %v1437, %v1438
        %v1440 = vsel %vm1404, %v224, 0.0
        %v1441 = vadd.f32 %v1439, %v1440
        %v1442 = vsel %vm1404, %v257, 0.0
        %v1443 = vadd.f32 %v1441, %v1442
        %v1444 = vsel %vm1404, %v225, 0.0
        %v1445 = vadd.f32 %v1443, %v1444
        %v1446 = vsel %vm1404, %v258, 0.0
        %v1447 = vadd.f32 %v1445, %v1446
        %v1448 = vsel %vm1404, %v226, 0.0
        %v1449 = vadd.f32 %v1447, %v1448
        %v1450 = vsel %vm1404, %v259, 0.0
        %v1451 = vadd.f32 %v1449, %v1450
        %v1452 = vsel %vm1404, %v227, 0.0
        %v1453 = vadd.f32 %v1451, %v1452
        %v1454 = vsel %vm1404, %v260, 0.0
        %v1455 = vadd.f32 %v1453, %v1454
        %v1456 = vsel %vm1404, %v228, 0.0
        %v1457 = vadd.f32 %v1455, %v1456
        %v1458 = vsel %vm1404, %v261, 0.0
        %v1459 = vadd.f32 %v1457, %v1458
        %v1460 = vsel %vm1404, %v229, 0.0
        %v1461 = vadd.f32 %v1459, %v1460
        %v1462 = vsel %vm1404, %v262, 0.0
        %v1463 = vadd.f32 %v1461, %v1462
        %v1464 = vsel %vm1404, %v230, 0.0
        %v1465 = vadd.f32 %v1463, %v1464
        %v1466 = vsel %vm1404, %v263, 0.0
        %v1467 = vadd.f32 %v1465, %v1466
        %1468 = vadd.xlane.f32.xlu0 %v1467
        %v1469 = vpop.xlane.xlu0 %1468
        %v1470 = vadd.f32 %v1403, %v1469
        %vm1471 = vcmask 3072
        %1472 = vst.msk [vmem:[%s205] sm:$0xf] %vm1471, %v1470
        %s1473 = sand.u32 %s79, 1
        %s1474 = scalar_lea.sflag [#allocation4], %s1473
        %s1475 = sand.u32 %s79, 1
        %s1476 = smul.addr %s1475, 4
        %s1477 = scalar_lea.vmem [#allocation5], %s1476
        %s1478 = sadd.s32 %s25, %s26
        %p1479 = scmp.lt.s32.totalorder %s1478, 1
        %s1480 = scalar_select %p1479, %s1478, 1
        %s1481 = smul.addr %s1480, 4
        %s1482 = scalar_lea.vmem %s2, %s1481
        // Predicated region
        $region33: #{tpu_custom_call.1} parent=23 // pred_check
          %p1483 = pneg %p89
        $region34: #{tpu_custom_call.1} parent=23 // pred_check_branch
          %1485 = sbr.rel (%p1483) target = $region36
        $region35: #{tpu_custom_call.1} parent=23 // pred_region
          %s1486 = sadd.s32 %s25, %s26
          %s1488 = ssub.s32 64, 64
          %1489 = vsyncadd %s1474, %s1488
          %s1490 = smul.addr %s1486, 64
          %s1491 = scalar_lea.hbm %s1, %s1490
          %s1493 = sshll.u32 %s1477, 4
          %s1494 = int_to_ptr.vmem [resolvable:$true] %s1493
          %1496 = dma.vmem_to_hbm [thread:$0]  %s1494, 64, %s1491, %s1474
        $region36: #{tpu_custom_call.1} parent=23 // pred_fallthru
          _
        // Predicated region
        $region37: #{tpu_custom_call.1} parent=23 // pred_check
          %p1497 = pneg %p117
        $region38: #{tpu_custom_call.1} parent=23 // pred_check_branch
          %1499 = sbr.rel (%p1497) target = $region40
        $region39: #{tpu_custom_call.1} parent=23 // pred_region
          %s1500 = sadd.s32 %s25, %s26
        $region40: #{tpu_custom_call.1} parent=23 // pred_fallthru
          _
      $region24: #{tpu_custom_call.1} parent=5 // pred_fallthru
        _
      %p1501 = scmp.le.s32.totalorder 2, %s15
      // Predicated region
      $region41: #{tpu_custom_call.1} parent=5 // pred_check
        %p1502 = pneg %p1501
      $region42: #{tpu_custom_call.1} parent=5 // pred_check_branch
        %1504 = sbr.rel (%p1502) target = $region44
      $region43: #{tpu_custom_call.1} parent=5 // pred_region
        %s1505 = ssub.s32 %s15, 2
        // Predicated region
        $region45: #{tpu_custom_call.1} parent=43 // pred_check
          %p1506 = pneg %p95
        $region46: #{tpu_custom_call.1} parent=43 // pred_check_branch
          %1508 = sbr.rel (%p1506) target = $region48
        $region47: #{tpu_custom_call.1} parent=43 // pred_region
          %s1509 = sand.u32 %s80, 1
          %s1510 = scalar_lea.sflag [#allocation4], %s1509
          %s1511 = sand.u32 %s80, 1
          %s1512 = smul.addr %s1511, 4
          %s1513 = scalar_lea.vmem [#allocation5], %s1512
          %1514 = dma.done %s1510, 64
        $region48: #{tpu_custom_call.1} parent=43 // pred_fallthru
          _
        // Predicated region
        $region49: #{tpu_custom_call.1} parent=43 // pred_check
          %p1515 = pneg %p123
        $region50: #{tpu_custom_call.1} parent=43 // pred_check_branch
          %1517 = sbr.rel (%p1515) target = $region52
        $region51: #{tpu_custom_call.1} parent=43 // pred_region
          %s1518 = sadd.s32 %s28, %s29
          %p1519 = scmp.lt.s32.totalorder %s1518, 1
          %s1520 = scalar_select %p1519, %s1518, 1
          %s1521 = smul.addr %s1520, 4
          %s1522 = scalar_lea.vmem %s2, %s1521
        $region52: #{tpu_custom_call.1} parent=43 // pred_fallthru
          _
      $region44: #{tpu_custom_call.1} parent=5 // pred_fallthru
        _
    $region6: #{tpu_custom_call.1} parent=1 // loop_footer
      %s19 = sadd.s32 1, %s15
    $region7: #{tpu_custom_call.1} parent=1 // loop_footer_branch
      %14 = sbr.rel target = $region3
    $region8: #{tpu_custom_call.1} parent=1 // loop_exit
      _
    %1523 = vsyncpa [#allocation3], 1
    %s1524 = scalar_lea.sflag [#allocation3], 1
    %1525 = vsyncpa %s1524, 1
    %1526 = vsyncpa [#allocation4], 1
    %s1527 = scalar_lea.sflag [#allocation4], 1
    %1528 = vsyncpa %s1527, 1

</llo_original>
